<compile_context>
chip_gen: v6e
topology: v6e:2x2x1
jax: 0.10.0
libtpu: 0.0.40
codegen_flags: <defaults>
</compile_context>

<pallas_src>
import jax
import jax.numpy as jnp
from jax.experimental import pallas as pl
from jax.experimental.pallas import tpu as pltpu

EPS = 1e-5


# ----------------------------------------------------------------------------
# Pallas kernel: one fused decoder stage; one (batch, time-block) tile / step.
# ----------------------------------------------------------------------------
def make_stage_kernel(C_out, F_out, TB, K, final):
    cnt_unit = float(C_out * F_out)        # LN entries per time step over (C,F)
    TBF = TB * F_out

    def kernel(patch_ref, w_ref, scal_ref, pool_ref, bcast_ref, out_ref,
               cs_ref, cs2_ref):
        tb = pl.program_id(1)

        # Reset the per-batch cumulative statistics at the first time block.
        # NOTE: relies on the time-block axis being innermost + "arbitrary".
        @pl.when(tb == 0)
        def _():
            cs_ref[...] = jnp.zeros_like(cs_ref)
            cs2_ref[...] = jnp.zeros_like(cs2_ref)

        # ---- Gated ConvTranspose2d for TB timesteps as ONE MXU matmul.
        #      bf16 operands, f32 accumulation, N = TB*F_out lane-dense.
        #      (M = 2*C_out is small; this kernel is DMA-bound, not MXU-bound.)
        p = patch_ref[...].reshape(K, TBF)                      # (K, TBF) bf16
        y = jnp.dot(w_ref[...], p, preferred_element_type=jnp.float32)
        y = y + scal_ref[:, 0:1]                                # bias (2C, 1)
        g = y[:C_out, :] * jax.nn.sigmoid(y[C_out:, :])         # (C, TBF) f32

        # ---- Cumulative LayerNorm over time, fused for the whole block.
        # lane <-> timestep mappings are 0/1 selection matmuls so everything
        # stays 2-D and lane-dense (no reshapes across the TBF lane axis).
        gsum = jnp.sum(g, axis=0, keepdims=True)                # (1, TBF)
        g2sum = jnp.sum(g * g, axis=0, keepdims=True)           # (1, TBF)
        s1 = jnp.dot(gsum, pool_ref[...],
                     preferred_element_type=jnp.float32)        # (1, TB)
        s2 = jnp.dot(g2sum, pool_ref[...],
                     preferred_element_type=jnp.float32)        # (1, TB)

        # In-block inclusive cumulative sum via an upper-triangular matmul.
        a_i = jax.lax.broadcasted_iota(jnp.int32, (TB, TB), 0)
        b_j = jax.lax.broadcasted_iota(jnp.int32, (TB, TB), 1)
        tri = (a_i <= b_j).astype(jnp.float32)                  # (TB, TB)

        cs_old = cs_ref[...]                                    # (1, 1)
        cs2_old = cs2_ref[...]
        cum1 = jnp.dot(s1, tri, preferred_element_type=jnp.float32) + cs_old
        cum2 = jnp.dot(s2, tri, preferred_element_type=jnp.float32) + cs2_old
        cs_ref[...] = cs_old + jnp.sum(s1, axis=1, keepdims=True)
        cs2_ref[...] = cs2_old + jnp.sum(s2, axis=1, keepdims=True)

        # entry counts 1 / (C*F*(t_abs+1)) per in-block timestep
        j_t = jax.lax.broadcasted_iota(jnp.int32, (1, TB), 1).astype(jnp.float32)
        t0 = (tb * TB).astype(jnp.float32)
        inv_cnt = 1.0 / (cnt_unit * (t0 + j_t + 1.0))           # (1, TB)

        mean_t = cum1 * inv_cnt
        var_t = (cum2 - 2.0 * mean_t * cum1) * inv_cnt + mean_t * mean_t
        var_t = jnp.maximum(var_t, 0.0)          # guard f32 cancellation
        rstd_t = jax.lax.rsqrt(var_t + EPS)      # EUP slot

        # broadcast per-timestep stats back onto the TB*F lane axis
        mean_l = jnp.dot(mean_t, bcast_ref[...],
                         preferred_element_type=jnp.float32)    # (1, TBF)
        rstd_l = jnp.dot(rstd_t, bcast_ref[...],
                         preferred_element_type=jnp.float32)    # (1, TBF)

        xn = (g - mean_l) * rstd_l
        xn = xn * scal_ref[:C_out, 1:2] + scal_ref[:C_out, 2:3]       # affine
        xp = jnp.where(xn >= 0.0, xn, xn * scal_ref[:C_out, 3:4])     # PReLU

        if final:
            # 1x1 conv head (C_out -> 1) as a VPU weighted reduce + sigmoid.
            r = jnp.sum(xp * scal_ref[:C_out, 4:5], axis=0, keepdims=True)
            r = jax.nn.sigmoid(r + scal_ref[0:1, 5:6])
            out_ref[...] = r.reshape(1, 1, 1, TBF)
        else:
            out_ref[...] = xp.astype(out_ref.dtype).reshape(1, 1, C_out, TBF)

    return kernel


def run_stage(patch, Wmat, scal, pool, bcast, F_out, TB, final):
    """patch: (B, nTB, K, TB*F_out) bf16; Wmat: (2C, K) bf16; scal: (2C, 8) f32;
    pool: (TB*F_out, TB) f32; bcast: (TB, TB*F_out) f32."""
    B, nTB, K, TBF = patch.shape
    C_out = Wmat.shape[0] // 2
    out_c = 1 if final else C_out
    out_dtype = jnp.float32 if final else jnp.bfloat16

    kernel = make_stage_kernel(C_out, F_out, TB, K, final)
    return pl.pallas_call(
        kernel,
        out_shape=jax.ShapeDtypeStruct((B, nTB, out_c, TBF), out_dtype),
        grid_spec=pltpu.PrefetchScalarGridSpec(
            num_scalar_prefetch=0,
            grid=(B, nTB),
            in_specs=[
                pl.BlockSpec((1, 1, K, TBF), lambda b, t: (b, t, 0, 0)),
                pl.BlockSpec(Wmat.shape, lambda b, t: (0, 0)),
                pl.BlockSpec(scal.shape, lambda b, t: (0, 0)),
                pl.BlockSpec(pool.shape, lambda b, t: (0, 0)),
                pl.BlockSpec(bcast.shape, lambda b, t: (0, 0)),
            ],
            out_specs=pl.BlockSpec((1, 1, out_c, TBF),
                                   lambda b, t: (b, t, 0, 0)),
            scratch_shapes=[pltpu.VMEM((1, 1), jnp.float32),   # cum sum
                            pltpu.VMEM((1, 1), jnp.float32)],  # cum sum of sq
        ),
        compiler_params=pltpu.CompilerParams(
            dimension_semantics=("parallel", "arbitrary"),
            vmem_limit_bytes=32 * 1024 * 1024),   # footprint ~1-2 MiB/step
    )(patch, Wmat, scal, pool, bcast)


# ----------------------------------------------------------------------------
# Glue: im2col for ConvTranspose2d(stride=(1,2)) + Chomp_T, blocking, packing.
# ----------------------------------------------------------------------------
def _pick_tb(F_out, T):
    """Time-block size: TB*F_out ~ 4K lanes, TB in [8, 128], <= T."""
    tb = max(8, min(128, 4096 // F_out))
    return max(1, min(tb, T))


def _make_selection_mats(TB, F_out):
    """pool (TB*F, TB): lane->timestep sum.  bcast (TB, TB*F): timestep->lane."""
    lane_t = jnp.arange(TB * F_out, dtype=jnp.int32) // F_out
    blk_t = jnp.arange(TB, dtype=jnp.int32)
    pool = (lane_t[:, None] == blk_t[None, :]).astype(jnp.float32)
    return pool, jnp.transpose(pool)


def im2col_convT_blocked(x_btcf, k_t, k_f, TB):
    """ConvTranspose2d(stride=(1,2)) (+ Chomp_T(k_t-1)) expressed as a stride-1
    correlation over a zero-dilated, causally padded input; the K-expanded
    patch is then time-blocked and folded lane-dense to (B,nTB,K,TB*F_out)."""
    B, T, C, F_in = x_btcf.shape
    F_dil = 2 * (F_in - 1) + 1
    x_d = jnp.zeros((B, T, C, F_dil), x_btcf.dtype)
    x_d = x_d.at[..., ::2].set(x_btcf)
    x_pad = jnp.pad(x_d, ((0, 0), (k_t - 1, 0), (0, 0), (k_f - 1, k_f - 1)))
    F_out = F_dil + k_f - 1
    cols = []
    for kt in range(k_t):
        for kf in range(k_f):
            cols.append(x_pad[:, kt:kt + T, :, kf:kf + F_out])
    patch = jnp.stack(cols, axis=3)               # (B, T, C, k_t*k_f, F_out)
    K = C * k_t * k_f
    patch = patch.reshape(B, T, K, F_out)

    nTB = -(-T // TB)
    T_pad = nTB * TB
    if T_pad != T:   # pad tail timesteps; causal LN => valid steps unaffected
        patch = jnp.pad(patch, ((0, 0), (0, T_pad - T), (0, 0), (0, 0)))
    patch = patch.reshape(B, nTB, TB, K, F_out)
    patch = jnp.transpose(patch, (0, 1, 3, 2, 4))         # (B,nTB,K,TB,F_out)
    patch = patch.reshape(B, nTB, K, TB * F_out)
    return patch, F_out, nTB


def unblock_output(out, T, TB, F_out):
    """(B, nTB, Cc, TB*F_out) -> (B, T, Cc, F_out)."""
    B, nTB, Cc, _ = out.shape
    out = out.reshape(B, nTB, Cc, TB, F_out)
    out = jnp.transpose(out, (0, 1, 3, 2, 4)).reshape(B, nTB * TB, Cc, F_out)
    return out[:, :T]


def pack_convT_weight(W):
    """torch ConvTranspose2d weight (C_in, 2*C_out, k_t, k_f) -> spatially
    flipped and packed to (2*C_out, C_in*k_t*k_f), matching the patch K-order."""
    Wf = W[:, :, ::-1, ::-1]
    Wm = jnp.transpose(Wf, (1, 0, 2, 3))
    return Wm.reshape(Wm.shape[0], -1)


def pack_scalars(p, C_out, final):
    """bias/gain/beta/alpha(/wout/bout) packed into one (2*C_out, 8) f32 tile."""
    scal = jnp.zeros((2 * C_out, 8), jnp.float32)
    scal = scal.at[:, 0].set(p['b'].reshape(-1))
    scal = scal.at[:C_out, 1].set(p['gain'].reshape(-1))
    scal = scal.at[:C_out, 2].set(p['beta'].reshape(-1))
    scal = scal.at[:C_out, 3].set(p['alpha'].reshape(-1))
    if final:
        scal = scal.at[:C_out, 4].set(p['wout'].reshape(-1))
        scal = scal.at[0, 5].set(p['bout'].reshape(()))
    return scal


def unet_decoder_forward(x_nchw, en_list_nchw, params, k1, inter_connect='add'):
    assert inter_connect == 'add'
    ks = [k1, k1, k1, k1, (1, 5)]
    # Channels-last (B, T, C, F) throughout: one transpose per input, none
    # between stages.
    x = jnp.transpose(x_nchw, (0, 2, 1, 3))
    en_btcf = [jnp.transpose(e, (0, 2, 1, 3)) for e in en_list_nchw]
    n = len(params)
    B, T = x.shape[0], x.shape[1]
    for i in range(n):
        inp = (x + en_btcf[-(i + 1)]).astype(jnp.bfloat16)
        k_t, k_f = ks[i]
        F_in = inp.shape[-1]
        F_out = 2 * (F_in - 1) + k_f
        TB = _pick_tb(F_out, T)
        patch, F_out, nTB = im2col_convT_blocked(inp, k_t, k_f, TB)
        p = params[i]
        final = (i == n - 1)
        C_out = p['W'].shape[1] // 2
        Wmat = pack_convT_weight(p['W']).astype(jnp.bfloat16)
        scal = pack_scalars(p, C_out, final)
        pool, bcast = _make_selection_mats(TB, F_out)
        out = run_stage(patch, Wmat, scal, pool, bcast, F_out, TB, final)
        y = unblock_output(out, T, TB, F_out)
        if final:
            x = y[:, :, 0, :]                 # (B, T, F)  == squeeze(dim=1)
        else:
            x = y                             # (B, T, C_out, F_out) bf16
    return x


# ----------------------------------------------------------------------------
# Pure-JAX reference (mirrors the PyTorch module, NCHW layout).
# ----------------------------------------------------------------------------
def _ref_gate_convT(x, W, b):
    """torch ConvTranspose2d(stride=(1,2)) (+ Chomp_T) -> chunk -> gate.
    Operands rounded to bf16 to match the kernel's MXU precision."""
    xw = x.astype(jnp.bfloat16).astype(jnp.float32)
    Ww = W.astype(jnp.bfloat16).astype(jnp.float32)
    B, C_in, T, F_in = x.shape
    _, C2, k_t, k_f = W.shape
    T_full = T + k_t - 1
    F_out = 2 * (F_in - 1) + k_f
    out = jnp.zeros((B, C2, T_full, F_out), jnp.float32)
    for p in range(k_t):
        for q in range(k_f):
            contrib = jnp.einsum('bitf,io->botf', xw, Ww[:, :, p, q])
            out = out.at[:, :, p:p + T, q:q + 2 * F_in:2].add(contrib)
    out = out + b.reshape(1, -1, 1, 1)
    if k_t > 1:
        out = out[:, :, :T, :]                # Chomp_T(k_t - 1)
    C_out = C2 // 2
    return out[:, :C_out] * jax.nn.sigmoid(out[:, C_out:])


def _ref_cumulative_layernorm(x, gain, beta, eps=EPS):
    B, C, T, F = x.shape
    step_sum = x.sum(axis=(1, 3), keepdims=True)
    step_pow = (x * x).sum(axis=(1, 3), keepdims=True)
    cum_sum = jnp.cumsum(step_sum, axis=2)
    cum_pow = jnp.cumsum(step_pow, axis=2)
    cnt = (jnp.arange(1, T + 1, dtype=jnp.float32) * float(C * F)
           ).reshape(1, 1, T, 1)
    mean = cum_sum / cnt
    var = (cum_pow - 2.0 * mean * cum_sum) / cnt + mean * mean
    var = jnp.maximum(var, 0.0)
    std = jnp.sqrt(var + eps)
    xn = (x - mean) / std
    return xn * gain.reshape(1, -1, 1, 1) + beta.reshape(1, -1, 1, 1)


def unet_decoder_ref(x, en_list, params, k1, inter_connect='add'):
    ks = [k1, k1, k1, k1, (1, 5)]
    n = len(params)
    for i in range(n):
        inp = x + en_list[-(i + 1)]
        p = params[i]
        g = _ref_gate_convT(inp, p['W'], p['b'])
        h = _ref_cumulative_layernorm(g, p['gain'], p['beta'])
        h = jnp.where(h >= 0.0, h, h * p['alpha'].reshape(1, -1, 1, 1))  # PReLU
        if i == n - 1:
            r = jnp.einsum('bctf,c->btf', h, p['wout'].reshape(-1))
            x = jax.nn.sigmoid(r + p['bout'].reshape(()))   # (B, T, F)
        else:
            x = h
    return x


# ----------------------------------------------------------------------------
def init_params(key, c, k1):
    c_begin, c_end = 64, 16
    kernel_end = (1, 5)
    specs = [(c_begin, c, k1), (c, c, k1), (c, c, k1), (c, c, k1),
             (c, c_end, kernel_end)]
    params = []
    for i, (cin, cout, k) in enumerate(specs):
        key, kw, kb, kg, kbe, ka = jax.random.split(key, 6)
        p = dict(
            W=jax.random.normal(kw, (cin, 2 * cout, k[0], k[1]),
                                jnp.float32) * 0.05,
            b=jax.random.normal(kb, (2 * cout,), jnp.float32) * 0.01,
            gain=1.0 + 0.1 * jax.random.normal(kg, (cout,), jnp.float32),
            beta=0.05 * jax.random.normal(kbe, (cout,), jnp.float32),
            alpha=0.25 + 0.05 * jax.random.normal(ka, (cout,), jnp.float32),
        )
        if i == len(specs) - 1:
            key, ko, kob = jax.random.split(key, 3)
            p['wout'] = jax.random.normal(ko, (cout, 1), jnp.float32) * 0.05
            p['bout'] = 0.01 * jax.random.normal(kob, (1, 1), jnp.float32)
        params.append(p)
    return params


if __name__ == "__main__":
    c = 8
    k1 = (2, 3)
    B, T, F0 = 2, 4, 3

    key = jax.random.PRNGKey(0)
    key, kx = jax.random.split(key)
    x = jax.random.normal(kx, (B, 64, T, F0), jnp.float32)

    # Frequency sizes produced by each decoder stage (skip inputs must match).
    F_list = [F0]
    for _ in range(4):
        F_list.append(2 * (F_list[-1] - 1) + k1[1])
    en_shapes = [(B, c, T, F_list[4]), (B, c, T, F_list[3]),
                 (B, c, T, F_list[2]), (B, c, T, F_list[1]),
                 (B, 64, T, F_list[0])]
    en_list = []
    for s in en_shapes:
        key, ke = jax.random.split(key)
        en_list.append(jax.random.normal(ke, s, jnp.float32))

    params = init_params(jax.random.PRNGKey(1), c, k1)

    out = unet_decoder_forward(x, en_list, params, k1, inter_connect='add')
    out = jax.block_until_ready(out)

    F_final = 2 * (F_list[4] - 1) + 5
    assert out.shape == (B, T, F_final), out.shape
    assert bool(jnp.all(jnp.isfinite(out)))

    ref = unet_decoder_ref(x, en_list, params, k1, inter_connect='add')
    ref = jax.block_until_ready(ref)
    max_err = float(jnp.max(jnp.abs(out - ref)))
    # bf16 intermediate-stage storage adds a small rounding vs. the f32 ref.
    assert jnp.allclose(out, ref, rtol=2e-2, atol=2e-2), max_err

    print("KERNEL_OK")
</pallas_src>

<mosaic_0001>
module attributes {stable_mosaic.version = 11 : i64} {
  func.func @kernel(%arg0: i32, %arg1: i32, %arg2: memref<1x1x384x28xbf16, #tpu.memory_space<vmem>>, %arg3: memref<16x384xbf16, #tpu.memory_space<vmem>>, %arg4: memref<16x8xf32, #tpu.memory_space<vmem>>, %arg5: memref<28x4xf32, #tpu.memory_space<vmem>>, %arg6: memref<4x28xf32, #tpu.memory_space<vmem>>, %arg7: memref<1x1x8x28xbf16, #tpu.memory_space<vmem>>, %arg8: memref<1x1xf32, #tpu.memory_space<vmem>>, %arg9: memref<1x1xf32, #tpu.memory_space<vmem>>) attributes {dimension_semantics = [#tpu.dimension_semantics<parallel>, #tpu.dimension_semantics<arbitrary>], iteration_bounds = array<i64: 2, 1>, scalar_prefetch = 0 : i64, scratch_operands = 2 : i64, tpu.core_type = #tpu.core_type<tc>, window_params = [{transform_indices = @transform_0, window_bounds = array<i64: 1, 1, 384, 28>}, {pipeline_mode = #tpu.pipeline_mode<synchronous>, transform_indices = @transform_1, window_bounds = array<i64: 16, 384>}, {pipeline_mode = #tpu.pipeline_mode<synchronous>, transform_indices = @transform_2, window_bounds = array<i64: 16, 8>}, {pipeline_mode = #tpu.pipeline_mode<synchronous>, transform_indices = @transform_3, window_bounds = array<i64: 28, 4>}, {pipeline_mode = #tpu.pipeline_mode<synchronous>, transform_indices = @transform_4, window_bounds = array<i64: 4, 28>}, {transform_indices = @transform_5, window_bounds = array<i64: 1, 1, 8, 28>}]} {
    %c0_i32 = arith.constant 0 : i32
    %0 = arith.cmpi eq, %arg1, %c0_i32 : i32
    %1 = arith.extui %0 : i1 to i32
    %c0_i32_0 = arith.constant 0 : i32
    %2 = arith.cmpi ne, %1, %c0_i32_0 : i32
    scf.if %2 {
      %cst_49 = arith.constant 0.000000e+00 : f32
      %96 = vector.broadcast %cst_49 : f32 to vector<1x1xf32>
      %c0_50 = arith.constant 0 : index
      %c0_51 = arith.constant 0 : index
      %97 = vector.load %arg8[%c0_50, %c0_51] : memref<1x1xf32, #tpu.memory_space<vmem>>, vector<1x1xf32>
      tpu.vector_store %arg8[%c0_50, %c0_51], %96 {strides = array<i32>} : memref<1x1xf32, #tpu.memory_space<vmem>>, vector<1x1xf32>,
      %cst_52 = arith.constant 0.000000e+00 : f32
      %98 = vector.broadcast %cst_52 : f32 to vector<1x1xf32>
      %c0_53 = arith.constant 0 : index
      %c0_54 = arith.constant 0 : index
      %99 = vector.load %arg9[%c0_53, %c0_54] : memref<1x1xf32, #tpu.memory_space<vmem>>, vector<1x1xf32>
      tpu.vector_store %arg9[%c0_53, %c0_54], %98 {strides = array<i32>} : memref<1x1xf32, #tpu.memory_space<vmem>>, vector<1x1xf32>,
    } else {
    }
    %c0 = arith.constant 0 : index
    %c0_1 = arith.constant 0 : index
    %c0_2 = arith.constant 0 : index
    %c0_3 = arith.constant 0 : index
    %3 = vector.load %arg2[%c0, %c0_1, %c0_2, %c0_3] : memref<1x1x384x28xbf16, #tpu.memory_space<vmem>>, vector<1x1x384x28xbf16>
    %4 = vector.shape_cast %3 : vector<1x1x384x28xbf16> to vector<384x28xbf16>
    %c0_4 = arith.constant 0 : index
    %c0_5 = arith.constant 0 : index
    %5 = vector.load %arg3[%c0_4, %c0_5] : memref<16x384xbf16, #tpu.memory_space<vmem>>, vector<16x384xbf16>
    %cst = arith.constant dense<0.000000e+00> : vector<16x28xf32>
    %6 = tpu.matmul %5, %4, %cst {dimension_numbers = #tpu.dot_dimension_numbers<[1], [0], [0], [1], [0, 0, 1, 1], [], []>} : vector<16x384xbf16>, vector<384x28xbf16>, vector<16x28xf32> -> vector<16x28xf32>
    %c0_6 = arith.constant 0 : index
    %c0_7 = arith.constant 0 : index
    %7 = vector.load %arg4[%c0_6, %c0_7] : memref<16x8xf32, #tpu.memory_space<vmem>>, vector<16x1xf32>
    %8 = vector.broadcast %7 : vector<16x1xf32> to vector<16x28xf32>
    %9 = arith.addf %6, %8 : vector<16x28xf32>
    %10 = vector.extract_strided_slice %9 {offsets = [0, 0], sizes = [8, 28], strides = [1, 1]} : vector<16x28xf32> to vector<8x28xf32>
    %11 = vector.extract_strided_slice %9 {offsets = [8, 0], sizes = [8, 28], strides = [1, 1]} : vector<16x28xf32> to vector<8x28xf32>
    %12 = arith.negf %11 : vector<8x28xf32>
    %13 = math.exp %12 : vector<8x28xf32>
    %cst_8 = arith.constant 1.000000e+00 : f32
    %14 = vector.broadcast %cst_8 : f32 to vector<8x28xf32>
    %15 = arith.addf %14, %13 : vector<8x28xf32>
    %16 = arith.divf %14, %15 : vector<8x28xf32>
    %17 = arith.mulf %10, %16 : vector<8x28xf32>
    %cst_9 = arith.constant dense<0.000000e+00> : vector<28xf32>
    %18 = vector.multi_reduction <add>, %17, %cst_9 [0] : vector<8x28xf32> to vector<28xf32>
    %19 = vector.shape_cast %18 : vector<28xf32> to vector<1x28xf32>
    %20 = arith.mulf %17, %17 : vector<8x28xf32>
    %cst_10 = arith.constant dense<0.000000e+00> : vector<28xf32>
    %21 = vector.multi_reduction <add>, %20, %cst_10 [0] : vector<8x28xf32> to vector<28xf32>
    %22 = vector.shape_cast %21 : vector<28xf32> to vector<1x28xf32>
    %c0_11 = arith.constant 0 : index
    %c0_12 = arith.constant 0 : index
    %23 = vector.load %arg5[%c0_11, %c0_12] : memref<28x4xf32, #tpu.memory_space<vmem>>, vector<28x4xf32>
    %cst_13 = arith.constant dense<0.000000e+00> : vector<1x4xf32>
    %24 = tpu.matmul %19, %23, %cst_13 {dimension_numbers = #tpu.dot_dimension_numbers<[1], [0], [0], [1], [0, 0, 1, 1], [], []>} : vector<1x28xf32>, vector<28x4xf32>, vector<1x4xf32> -> vector<1x4xf32>
    %c0_14 = arith.constant 0 : index
    %c0_15 = arith.constant 0 : index
    %25 = vector.load %arg5[%c0_14, %c0_15] : memref<28x4xf32, #tpu.memory_space<vmem>>, vector<28x4xf32>
    %cst_16 = arith.constant dense<0.000000e+00> : vector<1x4xf32>
    %26 = tpu.matmul %22, %25, %cst_16 {dimension_numbers = #tpu.dot_dimension_numbers<[1], [0], [0], [1], [0, 0, 1, 1], [], []>} : vector<1x28xf32>, vector<28x4xf32>, vector<1x4xf32> -> vector<1x4xf32>
    %27 = tpu.iota {dimensions = array<i32: 0>} : vector<4x4xi32>
    %28 = tpu.iota {dimensions = array<i32: 1>} : vector<4x4xi32>
    %29 = arith.cmpi sle, %27, %28 : vector<4x4xi32>
    %30 = arith.extui %29 : vector<4x4xi1> to vector<4x4xi32>
    %31 = arith.sitofp %30 : vector<4x4xi32> to vector<4x4xf32>
    %c0_17 = arith.constant 0 : index
    %c0_18 = arith.constant 0 : index
    %32 = vector.load %arg8[%c0_17, %c0_18] : memref<1x1xf32, #tpu.memory_space<vmem>>, vector<1x1xf32>
    %c0_19 = arith.constant 0 : index
    %c0_20 = arith.constant 0 : index
    %33 = vector.load %arg9[%c0_19, %c0_20] : memref<1x1xf32, #tpu.memory_space<vmem>>, vector<1x1xf32>
    %cst_21 = arith.constant dense<0.000000e+00> : vector<1x4xf32>
    %34 = tpu.matmul %24, %31, %cst_21 {dimension_numbers = #tpu.dot_dimension_numbers<[1], [0], [0], [1], [0, 0, 1, 1], [], []>} : vector<1x4xf32>, vector<4x4xf32>, vector<1x4xf32> -> vector<1x4xf32>
    %35 = vector.broadcast %32 : vector<1x1xf32> to vector<1x4xf32>
    %36 = arith.addf %34, %35 : vector<1x4xf32>
    %cst_22 = arith.constant dense<0.000000e+00> : vector<1x4xf32>
    %37 = tpu.matmul %26, %31, %cst_22 {dimension_numbers = #tpu.dot_dimension_numbers<[1], [0], [0], [1], [0, 0, 1, 1], [], []>} : vector<1x4xf32>, vector<4x4xf32>, vector<1x4xf32> -> vector<1x4xf32>
    %38 = vector.broadcast %33 : vector<1x1xf32> to vector<1x4xf32>
    %39 = arith.addf %37, %38 : vector<1x4xf32>
    %cst_23 = arith.constant dense<0.000000e+00> : vector<1xf32>
    %40 = vector.multi_reduction <add>, %24, %cst_23 [1] : vector<1x4xf32> to vector<1xf32>
    %41 = vector.shape_cast %40 : vector<1xf32> to vector<1x1xf32>
    %42 = arith.addf %32, %41 : vector<1x1xf32>
    %c0_24 = arith.constant 0 : index
    %c0_25 = arith.constant 0 : index
    %43 = vector.load %arg8[%c0_24, %c0_25] : memref<1x1xf32, #tpu.memory_space<vmem>>, vector<1x1xf32>
    tpu.vector_store %arg8[%c0_24, %c0_25], %42 {strides = array<i32>} : memref<1x1xf32, #tpu.memory_space<vmem>>, vector<1x1xf32>,
    %cst_26 = arith.constant dense<0.000000e+00> : vector<1xf32>
    %44 = vector.multi_reduction <add>, %26, %cst_26 [1] : vector<1x4xf32> to vector<1xf32>
    %45 = vector.shape_cast %44 : vector<1xf32> to vector<1x1xf32>
    %46 = arith.addf %33, %45 : vector<1x1xf32>
    %c0_27 = arith.constant 0 : index
    %c0_28 = arith.constant 0 : index
    %47 = vector.load %arg9[%c0_27, %c0_28] : memref<1x1xf32, #tpu.memory_space<vmem>>, vector<1x1xf32>
    tpu.vector_store %arg9[%c0_27, %c0_28], %46 {strides = array<i32>} : memref<1x1xf32, #tpu.memory_space<vmem>>, vector<1x1xf32>,
    %48 = tpu.iota {dimensions = array<i32: 1>} : vector<1x4xi32>
    %49 = arith.sitofp %48 : vector<1x4xi32> to vector<1x4xf32>
    %c4_i32 = arith.constant 4 : i32
    %50 = arith.muli %arg1, %c4_i32 : i32
    %51 = arith.sitofp %50 : i32 to f32
    %52 = vector.broadcast %51 : f32 to vector<1x4xf32>
    %53 = arith.addf %52, %49 : vector<1x4xf32>
    %cst_29 = arith.constant 1.000000e+00 : f32
    %54 = vector.broadcast %cst_29 : f32 to vector<1x4xf32>
    %55 = arith.addf %53, %54 : vector<1x4xf32>
    %cst_30 = arith.constant 5.600000e+01 : f32
    %56 = vector.broadcast %cst_30 : f32 to vector<1x4xf32>
    %57 = arith.mulf %56, %55 : vector<1x4xf32>
    %cst_31 = arith.constant 1.000000e+00 : f32
    %58 = vector.broadcast %cst_31 : f32 to vector<1x4xf32>
    %59 = arith.divf %58, %57 : vector<1x4xf32>
    %60 = arith.mulf %36, %59 : vector<1x4xf32>
    %cst_32 = arith.constant 2.000000e+00 : f32
    %61 = vector.broadcast %cst_32 : f32 to vector<1x4xf32>
    %62 = arith.mulf %61, %60 : vector<1x4xf32>
    %63 = arith.mulf %62, %36 : vector<1x4xf32>
    %64 = arith.subf %39, %63 : vector<1x4xf32>
    %65 = arith.mulf %64, %59 : vector<1x4xf32>
    %66 = arith.mulf %60, %60 : vector<1x4xf32>
    %67 = arith.addf %65, %66 : vector<1x4xf32>
    %cst_33 = arith.constant 0.000000e+00 : f32
    %68 = vector.broadcast %cst_33 : f32 to vector<1x4xf32>
    %69 = arith.maximumf %67, %68 : vector<1x4xf32>
    %cst_34 = arith.constant 9.99999974E-6 : f32
    %70 = vector.broadcast %cst_34 : f32 to vector<1x4xf32>
    %71 = arith.addf %69, %70 : vector<1x4xf32>
    %72 = math.rsqrt %71 : vector<1x4xf32>
    %c0_35 = arith.constant 0 : index
    %c0_36 = arith.constant 0 : index
    %73 = vector.load %arg6[%c0_35, %c0_36] : memref<4x28xf32, #tpu.memory_space<vmem>>, vector<4x28xf32>
    %cst_37 = arith.constant dense<0.000000e+00> : vector<1x28xf32>
    %74 = tpu.matmul %60, %73, %cst_37 {dimension_numbers = #tpu.dot_dimension_numbers<[1], [0], [0], [1], [0, 0, 1, 1], [], []>} : vector<1x4xf32>, vector<4x28xf32>, vector<1x28xf32> -> vector<1x28xf32>
    %c0_38 = arith.constant 0 : index
    %c0_39 = arith.constant 0 : index
    %75 = vector.load %arg6[%c0_38, %c0_39] : memref<4x28xf32, #tpu.memory_space<vmem>>, vector<4x28xf32>
    %cst_40 = arith.constant dense<0.000000e+00> : vector<1x28xf32>
    %76 = tpu.matmul %72, %75, %cst_40 {dimension_numbers = #tpu.dot_dimension_numbers<[1], [0], [0], [1], [0, 0, 1, 1], [], []>} : vector<1x4xf32>, vector<4x28xf32>, vector<1x28xf32> -> vector<1x28xf32>
    %77 = vector.broadcast %74 : vector<1x28xf32> to vector<8x28xf32>
    %78 = arith.subf %17, %77 : vector<8x28xf32>
    %79 = vector.broadcast %76 : vector<1x28xf32> to vector<8x28xf32>
    %80 = arith.mulf %78, %79 : vector<8x28xf32>
    %c0_41 = arith.constant 0 : index
    %c1 = arith.constant 1 : index
    %81 = vector.load %arg4[%c0_41, %c1] : memref<16x8xf32, #tpu.memory_space<vmem>>, vector<8x1xf32>
    %82 = vector.broadcast %81 : vector<8x1xf32> to vector<8x28xf32>
    %83 = arith.mulf %80, %82 : vector<8x28xf32>
    %c0_42 = arith.constant 0 : index
    %c2 = arith.constant 2 : index
    %84 = vector.load %arg4[%c0_42, %c2] : memref<16x8xf32, #tpu.memory_space<vmem>>, vector<8x1xf32>
    %85 = vector.broadcast %84 : vector<8x1xf32> to vector<8x28xf32>
    %86 = arith.addf %83, %85 : vector<8x28xf32>
    %cst_43 = arith.constant 0.000000e+00 : f32
    %87 = vector.broadcast %cst_43 : f32 to vector<8x28xf32>
    %88 = arith.cmpf oge, %86, %87 : vector<8x28xf32>
    %c0_44 = arith.constant 0 : index
    %c3 = arith.constant 3 : index
    %89 = vector.load %arg4[%c0_44, %c3] : memref<16x8xf32, #tpu.memory_space<vmem>>, vector<8x1xf32>
    %90 = vector.broadcast %89 : vector<8x1xf32> to vector<8x28xf32>
    %91 = arith.mulf %86, %90 : vector<8x28xf32>
    %92 = arith.select %88, %86, %91 : vector<8x28xi1>, vector<8x28xf32>
    %93 = arith.truncf %92 : vector<8x28xf32> to vector<8x28xbf16>
    %94 = vector.shape_cast %93 : vector<8x28xbf16> to vector<1x1x8x28xbf16>
    %c0_45 = arith.constant 0 : index
    %c0_46 = arith.constant 0 : index
    %c0_47 = arith.constant 0 : index
    %c0_48 = arith.constant 0 : index
    %95 = vector.load %arg7[%c0_45, %c0_46, %c0_47, %c0_48] : memref<1x1x8x28xbf16, #tpu.memory_space<vmem>>, vector<1x1x8x28xbf16>
    tpu.vector_store %arg7[%c0_45, %c0_46, %c0_47, %c0_48], %94 {strides = array<i32>} : memref<1x1x8x28xbf16, #tpu.memory_space<vmem>>, vector<1x1x8x28xbf16>,
    return
  }
  func.func @transform_0(%arg0: i32, %arg1: i32) -> (i32, i32, i32, i32) {
    %c0_i32 = arith.constant 0 : i32
    %c0_i32_0 = arith.constant 0 : i32
    %c0_i32_1 = arith.constant 0 : i32
    return %arg0, %arg1, %c0_i32, %c0_i32_0 : i32, i32, i32, i32
  }
  func.func @transform_1(%arg0: i32, %arg1: i32) -> (i32, i32) {
    %c0_i32 = arith.constant 0 : i32
    %c0_i32_0 = arith.constant 0 : i32
    %c0_i32_1 = arith.constant 0 : i32
    return %c0_i32, %c0_i32_0 : i32, i32
  }
  func.func @transform_2(%arg0: i32, %arg1: i32) -> (i32, i32) {
    %c0_i32 = arith.constant 0 : i32
    %c0_i32_0 = arith.constant 0 : i32
    %c0_i32_1 = arith.constant 0 : i32
    return %c0_i32, %c0_i32_0 : i32, i32
  }
  func.func @transform_3(%arg0: i32, %arg1: i32) -> (i32, i32) {
    %c0_i32 = arith.constant 0 : i32
    %c0_i32_0 = arith.constant 0 : i32
    %c0_i32_1 = arith.constant 0 : i32
    return %c0_i32, %c0_i32_0 : i32, i32
  }
  func.func @transform_4(%arg0: i32, %arg1: i32) -> (i32, i32) {
    %c0_i32 = arith.constant 0 : i32
    %c0_i32_0 = arith.constant 0 : i32
    %c0_i32_1 = arith.constant 0 : i32
    return %c0_i32, %c0_i32_0 : i32, i32
  }
  func.func @transform_5(%arg0: i32, %arg1: i32) -> (i32, i32, i32, i32) {
    %c0_i32 = arith.constant 0 : i32
    %c0_i32_0 = arith.constant 0 : i32
    %c0_i32_1 = arith.constant 0 : i32
    return %arg0, %arg1, %c0_i32, %c0_i32_0 : i32, i32, i32, i32
  }
}

</mosaic_0001>

<llo_original>
// kernel: tpu_custom_call.1
$region0: #{tpu_custom_call.1}
  #allocation0 [shape = 'u32[]', space=smem, size = 0x4, offset = 0x4, fixed_abs, tag = 'smem constant byte address 0x4 - core index']
  #allocation1 [shape = 'u32[144,128]{1,0:T(1,128)}', space=vmem, size = 0x12000, scoped, tag = 'internal scratch']
  #allocation2 [shape = 'f32[1,1]{1,0:T(1,128)}', space=vmem, size = 0x200, scoped, tag = 'scratch operand']
  #allocation3 [shape = 'f32[1,1]{1,0:T(1,128)}', space=vmem, size = 0x200, scoped, tag = 'scratch operand']
  %s0 = inlined_call_operand.vmem [shape: bf16[2,1,384,28], index: 0, kind: input, shape index: {}]
  %s1 = inlined_call_operand.vmem [shape: bf16[16,384], index: 1, kind: input, shape index: {}]
  %s2 = inlined_call_operand.vmem [shape: f32[16,8], index: 2, kind: input, shape index: {}]
  %s3 = inlined_call_operand.vmem [shape: f32[28,4], index: 3, kind: input, shape index: {}]
  %s4 = inlined_call_operand.vmem [shape: f32[4,28], index: 4, kind: input, shape index: {}]
  %s5 = inlined_call_operand.hbm [shape: bf16[2,1,8,28], index: 5, kind: output, shape index: {}]
  %s6 = sld [smem:[#allocation0]]
  $region57: #{tpu_custom_call.1} parent=0
    _
  %s8 = ssub.s32 1, %s6
  %s9 = scalar_select 0, %s8, %s6
  $region1: #{tpu_custom_call.1} parent=0
    #allocation4 [shape = 'u8[4096]{0}', space=vmem, size = 0x1000, scoped, tag = 'output window, operand 0']
    #allocation5 [shape = 's32[2]{0}', space=sflag, size = 0x8, scoped, tag = 'scoped memory for tpu_custom_call.1']
    %10 = vsyncpa [#allocation5], 0
    %s11 = scalar_lea.sflag [#allocation5], 1
    %12 = vsyncpa %s11, 0
    loop: start=0, step=1, limit=4
    $region2: #{tpu_custom_call.1} parent=1 // loop_pre_header
      _
    $region3: #{tpu_custom_call.1} parent=1 // loop_header
      %s14 = sphi 0, %s18
      %p15 = scmp.ge.s32.totalorder %s14, 4
      %s21 = sphi 0, %s33
      %s22 = sphi 0, %s29
      %s23 = sphi 0, %s21
      %s24 = sphi 0, %s22
      %s25 = sphi 0, %s23
      %s26 = sphi 0, %s24
      %s38 = sphi 0, %s40
      %s41 = sphi 0, %s38
      %s42 = sphi 0, %s41
      %s58 = sphi 0, %s42
      %s62 = sphi 0, %s62
      %s64 = sphi 0, %s62
      %s65 = sphi 0, %s64
      %s79 = sphi 0, %s65
      %s83 = sphi 0, %s83
      %s85 = sphi 0, %s83
      %s86 = sphi 0, %s85
      %s100 = sphi 0, %s86
      %s104 = sphi 0, %s104
      %s106 = sphi 0, %s104
      %s107 = sphi 0, %s106
      %s121 = sphi 0, %s107
      %s125 = sphi 0, %s125
      %s127 = sphi 0, %s125
      %s128 = sphi 0, %s127
      %s142 = sphi 0, %s128
      %s150 = sphi 0, %s152
      %s153 = sphi 0, %s150
      %s154 = sphi 0, %s153
      %s170 = sphi 0, %s154
    $region4: #{tpu_custom_call.1} parent=1 // loop_header_branch
      %17 = sbr.rel (%p15) target = $region8
    $region5: #{tpu_custom_call.1} parent=1 // loop_body
      %s19 = ssub.s32 %s14, 1
      %s20 = ssub.s32 %s14, 2
      %s27 = sadd.s32 1, %s22
      %p28 = scmp.ge.s32.totalorder %s27, 1
      %s29 = scalar_select %p28, 0, %s27
      %s30 = sadd.s32 1, %s21
      %s31 = scalar_select %p28, %s30, %s21
      %p32 = scmp.ge.s32.totalorder %s31, 2
      %s33 = scalar_select %p32, 0, %s31
      %s34 = ssub.s32 %s21, %s33
      %s35 = ssub.s32 %s22, %s29
      %s36 = sor.u32 %s34, %s35
      %p37 = scmp.eq.s32.totalorder %s36, 0
      %s39 = sadd.s32 %s38, 1
      %s40 = scalar_select %p37, %s38, %s39
      %p43 = pneg %p37
      %p44 = scmp.eq.s32.totalorder %s14, 1
      %p45 = por %p43, %p44
      %p46 = scmp.ne.s32.totalorder %s38, %s41
      %p47 = scmp.eq.s32.totalorder %s14, 0
      %p48 = por %p46, %p47
      %p49 = scmp.ne.s32.totalorder %s38, %s41
      %p50 = scmp.eq.s32.totalorder %s19, 1
      %p51 = por %p49, %p50
      %p52 = scmp.ne.s32.totalorder %s41, %s42
      %p53 = scmp.eq.s32.totalorder %s19, 0
      %p54 = por %p52, %p53
      %p55 = scmp.ne.s32.totalorder %s41, %s42
      %p56 = scmp.eq.s32.totalorder %s20, 1
      %p57 = por %p55, %p56
      %p59 = scmp.ne.s32.totalorder %s42, %s58
      %p60 = scmp.eq.s32.totalorder %s20, 0
      %p61 = por %p59, %p60
      %s63 = sadd.s32 %s62, 1
      %p66 = scmp.eq.s32.totalorder %s14, 1
      %p67 = scmp.ne.s32.totalorder %s62, %s64
      %p68 = scmp.eq.s32.totalorder %s14, 0
      %p69 = por %p67, %p68
      %p70 = scmp.ne.s32.totalorder %s62, %s64
      %p71 = scmp.eq.s32.totalorder %s19, 1
      %p72 = por %p70, %p71
      %p73 = scmp.ne.s32.totalorder %s64, %s65
      %p74 = scmp.eq.s32.totalorder %s19, 0
      %p75 = por %p73, %p74
      %p76 = scmp.ne.s32.totalorder %s64, %s65
      %p77 = scmp.eq.s32.totalorder %s20, 1
      %p78 = por %p76, %p77
      %p80 = scmp.ne.s32.totalorder %s65, %s79
      %p81 = scmp.eq.s32.totalorder %s20, 0
      %p82 = por %p80, %p81
      %s84 = sadd.s32 %s83, 1
      %p87 = scmp.eq.s32.totalorder %s14, 1
      %p88 = scmp.ne.s32.totalorder %s83, %s85
      %p89 = scmp.eq.s32.totalorder %s14, 0
      %p90 = por %p88, %p89
      %p91 = scmp.ne.s32.totalorder %s83, %s85
      %p92 = scmp.eq.s32.totalorder %s19, 1
      %p93 = por %p91, %p92
      %p94 = scmp.ne.s32.totalorder %s85, %s86
      %p95 = scmp.eq.s32.totalorder %s19, 0
      %p96 = por %p94, %p95
      %p97 = scmp.ne.s32.totalorder %s85, %s86
      %p98 = scmp.eq.s32.totalorder %s20, 1
      %p99 = por %p97, %p98
      %p101 = scmp.ne.s32.totalorder %s86, %s100
      %p102 = scmp.eq.s32.totalorder %s20, 0
      %p103 = por %p101, %p102
      %s105 = sadd.s32 %s104, 1
      %p108 = scmp.eq.s32.totalorder %s14, 1
      %p109 = scmp.ne.s32.totalorder %s104, %s106
      %p110 = scmp.eq.s32.totalorder %s14, 0
      %p111 = por %p109, %p110
      %p112 = scmp.ne.s32.totalorder %s104, %s106
      %p113 = scmp.eq.s32.totalorder %s19, 1
      %p114 = por %p112, %p113
      %p115 = scmp.ne.s32.totalorder %s106, %s107
      %p116 = scmp.eq.s32.totalorder %s19, 0
      %p117 = por %p115, %p116
      %p118 = scmp.ne.s32.totalorder %s106, %s107
      %p119 = scmp.eq.s32.totalorder %s20, 1
      %p120 = por %p118, %p119
      %p122 = scmp.ne.s32.totalorder %s107, %s121
      %p123 = scmp.eq.s32.totalorder %s20, 0
      %p124 = por %p122, %p123
      %s126 = sadd.s32 %s125, 1
      %p129 = scmp.eq.s32.totalorder %s14, 1
      %p130 = scmp.ne.s32.totalorder %s125, %s127
      %p131 = scmp.eq.s32.totalorder %s14, 0
      %p132 = por %p130, %p131
      %p133 = scmp.ne.s32.totalorder %s125, %s127
      %p134 = scmp.eq.s32.totalorder %s19, 1
      %p135 = por %p133, %p134
      %p136 = scmp.ne.s32.totalorder %s127, %s128
      %p137 = scmp.eq.s32.totalorder %s19, 0
      %p138 = por %p136, %p137
      %p139 = scmp.ne.s32.totalorder %s127, %s128
      %p140 = scmp.eq.s32.totalorder %s20, 1
      %p141 = por %p139, %p140
      %p143 = scmp.ne.s32.totalorder %s128, %s142
      %p144 = scmp.eq.s32.totalorder %s20, 0
      %p145 = por %p143, %p144
      %s146 = ssub.s32 %s21, %s33
      %s147 = ssub.s32 %s22, %s29
      %s148 = sor.u32 %s146, %s147
      %p149 = scmp.eq.s32.totalorder %s148, 0
      %s151 = sadd.s32 %s150, 1
      %s152 = scalar_select %p149, %s150, %s151
      %p155 = pneg %p149
      %p156 = scmp.eq.s32.totalorder %s14, 1
      %p157 = por %p155, %p156
      %p158 = scmp.ne.s32.totalorder %s150, %s153
      %p159 = scmp.eq.s32.totalorder %s14, 0
      %p160 = por %p158, %p159
      %p161 = scmp.ne.s32.totalorder %s150, %s153
      %p162 = scmp.eq.s32.totalorder %s19, 1
      %p163 = por %p161, %p162
      %p164 = scmp.ne.s32.totalorder %s153, %s154
      %p165 = scmp.eq.s32.totalorder %s19, 0
      %p166 = por %p164, %p165
      %p167 = scmp.ne.s32.totalorder %s153, %s154
      %p168 = scmp.eq.s32.totalorder %s20, 1
      %p169 = por %p167, %p168
      %p171 = scmp.ne.s32.totalorder %s154, %s170
      %p172 = scmp.eq.s32.totalorder %s20, 0
      %p173 = por %p171, %p172
      %p174 = scmp.le.s32.totalorder 1, %s14
      %p175 = scmp.lt.s32.totalorder %s14, 3
      %p176 = pnand %p174, %p175
      %p177 = pneg %p176
      // Predicated region
      $region9: #{tpu_custom_call.1} parent=5 // pred_check
        _
      $region10: #{tpu_custom_call.1} parent=5 // pred_check_branch
        %179 = sbr.rel (%p176) target = $region12
      $region11: #{tpu_custom_call.1} parent=5 // pred_region
        %s180 = ssub.s32 %s14, 1
        // Predicated region
        $region13: #{tpu_custom_call.1} parent=11 // pred_check
          %p181 = pneg %p75
        $region14: #{tpu_custom_call.1} parent=11 // pred_check_branch
          %183 = sbr.rel (%p181) target = $region16
        $region15: #{tpu_custom_call.1} parent=11 // pred_region
          _
        $region16: #{tpu_custom_call.1} parent=11 // pred_fallthru
          _
        // Predicated region
        $region17: #{tpu_custom_call.1} parent=11 // pred_check
          %p184 = pneg %p96
        $region18: #{tpu_custom_call.1} parent=11 // pred_check_branch
          %186 = sbr.rel (%p184) target = $region20
        $region19: #{tpu_custom_call.1} parent=11 // pred_region
          _
        $region20: #{tpu_custom_call.1} parent=11 // pred_fallthru
          _
        // Predicated region
        $region21: #{tpu_custom_call.1} parent=11 // pred_check
          %p187 = pneg %p117
        $region22: #{tpu_custom_call.1} parent=11 // pred_check_branch
          %189 = sbr.rel (%p187) target = $region24
        $region23: #{tpu_custom_call.1} parent=11 // pred_region
          _
        $region24: #{tpu_custom_call.1} parent=11 // pred_fallthru
          _
        // Predicated region
        $region25: #{tpu_custom_call.1} parent=11 // pred_check
          %p190 = pneg %p138
        $region26: #{tpu_custom_call.1} parent=11 // pred_check_branch
          %192 = sbr.rel (%p190) target = $region28
        $region27: #{tpu_custom_call.1} parent=11 // pred_region
          _
        $region28: #{tpu_custom_call.1} parent=11 // pred_fallthru
          _
      $region12: #{tpu_custom_call.1} parent=5 // pred_fallthru
        _
      %p193 = scmp.lt.s32.totalorder %s14, 2
      // Predicated region
      $region29: #{tpu_custom_call.1} parent=5 // pred_check
        %p194 = pneg %p193
      $region30: #{tpu_custom_call.1} parent=5 // pred_check_branch
        %196 = sbr.rel (%p194) target = $region32
      $region31: #{tpu_custom_call.1} parent=5 // pred_region
        // Predicated region
        $region33: #{tpu_custom_call.1} parent=31 // pred_check
          %p197 = pneg %p48
        $region34: #{tpu_custom_call.1} parent=31 // pred_check_branch
          %199 = sbr.rel (%p197) target = $region36
        $region35: #{tpu_custom_call.1} parent=31 // pred_region
          %p200 = scmp.lt.s32.totalorder %s21, 1
          %s201 = scalar_select %p200, %s21, 1
          %p202 = scmp.lt.s32.totalorder %s22, 0
          %s203 = scalar_select %p202, %s22, 0
          %s204 = smul.addr %s203, 48
          %s205 = smul.addr %s201, 48
          %s206 = sadd.s32 %s204, %s205
          %s207 = smul.addr %s206, 4
          %s208 = scalar_lea.vmem %s0, %s207
        $region36: #{tpu_custom_call.1} parent=31 // pred_fallthru
          _
      $region32: #{tpu_custom_call.1} parent=5 // pred_fallthru
        _
      %p209 = scmp.le.s32.totalorder 1, %s14
      %p210 = scmp.lt.s32.totalorder %s14, 3
      %p211 = pnand %p209, %p210
      %p212 = pneg %p211
      // Predicated region
      $region37: #{tpu_custom_call.1} parent=5 // pred_check
        _
      $region38: #{tpu_custom_call.1} parent=5 // pred_check_branch
        %214 = sbr.rel (%p211) target = $region40
      $region39: #{tpu_custom_call.1} parent=5 // pred_region
        %s215 = ssub.s32 %s14, 1
        %p216 = scmp.lt.s32.totalorder %s23, 1
        %s217 = scalar_select %p216, %s23, 1
        %p218 = scmp.lt.s32.totalorder %s24, 0
        %s219 = scalar_select %p218, %s24, 0
        %s220 = smul.addr %s219, 48
        %s221 = smul.addr %s217, 48
        %s222 = sadd.s32 %s220, %s221
        %s223 = smul.addr %s222, 4
        %s224 = scalar_lea.vmem %s0, %s223
        %p225 = pneg %p54
        %p226 = pneg %p51
        %p227 = pneg %p75
        %p228 = pneg %p72
        %p229 = pneg %p96
        %p230 = pneg %p93
        %p231 = pneg %p117
        %p232 = pneg %p114
        %p233 = pneg %p138
        %p234 = pneg %p135
        %p235 = pneg %p166
        %p236 = pneg %p163
        %s237 = sand.u32 %s153, 1
        %s238 = scalar_lea.sflag [#allocation5], %s237
        %s239 = sand.u32 %s153, 1
        %s240 = smul.addr %s239, 4
        %s241 = scalar_lea.vmem [#allocation4], %s240
        %p242 = scmp.lt.s32.totalorder %s23, 1
        %s243 = scalar_select %p242, %s23, 1
        %p244 = scmp.lt.s32.totalorder %s24, 0
        %s245 = scalar_select %p244, %s24, 0
        %s246 = smul.addr %s245, 48
        %s247 = smul.addr %s243, 48
        %s248 = sadd.s32 %s246, %s247
        %s249 = smul.addr %s248, 4
        %s250 = scalar_lea.vmem %s0, %s249
        %p252 = scmp.eq.s32.totalorder %s24, 0
        // Predicated region
        $region41: #{tpu_custom_call.1} parent=39 // pred_check
          %p253 = pneg %p252
        $region42: #{tpu_custom_call.1} parent=39 // pred_check_branch
          %255 = sbr.rel (%p253) target = $region44
        $region43: #{tpu_custom_call.1} parent=39 // pred_region
          %vm256 = vcmask 0
          %257 = vst.msk [vmem:[#allocation2] sm:$0x1] %vm256, 0.0
          %258 = vst.msk [vmem:[#allocation3] sm:$0x1] %vm256, 0.0
        $region44: #{tpu_custom_call.1} parent=39 // pred_fallthru
          _
        %v259 = vld [vmem:[%s250] sm:$0xf]
        %v260 = vld [vmem:[%s250 + $0x4] sm:$0xf]
        %v261 = vld [vmem:[%s250 + $0x8] sm:$0xf]
        %v262 = vld [vmem:[%s250 + $0xc] sm:$0xf]
        %v263 = vld [vmem:[%s250 + $0x10] sm:$0xf]
        %v264 = vld [vmem:[%s250 + $0x14] sm:$0xf]
        %v265 = vld [vmem:[%s250 + $0x18] sm:$0xf]
        %v266 = vld [vmem:[%s250 + $0x1c] sm:$0xf]
        %v267 = vld [vmem:[%s250 + $0x20] sm:$0xf]
        %v268 = vld [vmem:[%s250 + $0x24] sm:$0xf]
        %v269 = vld [vmem:[%s250 + $0x28] sm:$0xf]
        %v270 = vld [vmem:[%s250 + $0x2c] sm:$0xf]
        %v271 = vld [vmem:[%s250 + $0x30] sm:$0xf]
        %v272 = vld [vmem:[%s250 + $0x34] sm:$0xf]
        %v273 = vld [vmem:[%s250 + $0x38] sm:$0xf]
        %v274 = vld [vmem:[%s250 + $0x3c] sm:$0xf]
        %v275 = vld [vmem:[%s250 + $0x40] sm:$0xf]
        %v276 = vld [vmem:[%s250 + $0x44] sm:$0xf]
        %v277 = vld [vmem:[%s250 + $0x48] sm:$0xf]
        %v278 = vld [vmem:[%s250 + $0x4c] sm:$0xf]
        %v279 = vld [vmem:[%s250 + $0x50] sm:$0xf]
        %v280 = vld [vmem:[%s250 + $0x54] sm:$0xf]
        %v281 = vld [vmem:[%s250 + $0x58] sm:$0xf]
        %v282 = vld [vmem:[%s250 + $0x5c] sm:$0xf]
        %v283 = vld [vmem:[%s250 + $0x60] sm:$0xf]
        %v284 = vld [vmem:[%s250 + $0x64] sm:$0xf]
        %v285 = vld [vmem:[%s250 + $0x68] sm:$0xf]
        %v286 = vld [vmem:[%s250 + $0x6c] sm:$0xf]
        %v287 = vld [vmem:[%s250 + $0x70] sm:$0xf]
        %v288 = vld [vmem:[%s250 + $0x74] sm:$0xf]
        %v289 = vld [vmem:[%s250 + $0x78] sm:$0xf]
        %v290 = vld [vmem:[%s250 + $0x7c] sm:$0xf]
        %v291 = vld [vmem:[%s250 + $0x80] sm:$0xf]
        %v292 = vld [vmem:[%s250 + $0x84] sm:$0xf]
        %v293 = vld [vmem:[%s250 + $0x88] sm:$0xf]
        %v294 = vld [vmem:[%s250 + $0x8c] sm:$0xf]
        %v295 = vld [vmem:[%s250 + $0x90] sm:$0xf]
        %v296 = vld [vmem:[%s250 + $0x94] sm:$0xf]
        %v297 = vld [vmem:[%s250 + $0x98] sm:$0xf]
        %v298 = vld [vmem:[%s250 + $0x9c] sm:$0xf]
        %v299 = vld [vmem:[%s250 + $0xa0] sm:$0xf]
        %v300 = vld [vmem:[%s250 + $0xa4] sm:$0xf]
        %v301 = vld [vmem:[%s250 + $0xa8] sm:$0xf]
        %v302 = vld [vmem:[%s250 + $0xac] sm:$0xf]
        %v303 = vld [vmem:[%s250 + $0xb0] sm:$0xf]
        %v304 = vld [vmem:[%s250 + $0xb4] sm:$0xf]
        %v305 = vld [vmem:[%s250 + $0xb8] sm:$0xf]
        %v306 = vld [vmem:[%s250 + $0xbc] sm:$0xf]
        %v307 = vld [vmem:[%s1] sm:$0xff]
        %v308 = vld [vmem:[%s1 + $0x8] sm:$0xf]
        %v309 = vld [vmem:[%s1 + $0xc] sm:$0xff]
        %v310 = vld [vmem:[%s1 + $0x14] sm:$0xf]
        %v311 = vld [vmem:[%s2] sm:$0xff]
        %v312 = vld [vmem:[%s2 + $0x8] sm:$0xff]
        %314 = vset.pattern.permute.xlu0 0
        %315 = vperm.xlu0 %314, %v311
        %v316 = vpop.permute.xlu0 %315
        %319 = vset.pattern.permute.xlu0 0
        %320 = vperm.xlu0 %319, %v312
        %v321 = vpop.permute.xlu0 %320
        %v327 = vunpack.c.l.b16 %v307
        %v328 = vunpack.c.h.b16 %v307
        %v329 = vunpack.c.l.b16 %v308
        %v330 = vunpack.c.l.b16 %v309
        %v331 = vunpack.c.h.b16 %v309
        %v332 = vunpack.c.l.b16 %v310
        %v333 = vpack.c.b16 %v330, %v327
        %v334 = vpack.c.b16 %v331, %v328
        %v335 = vpack.c.b16 %v332, %v329
        %v387 = vunpack.c.l.b16 %v259
        %v388 = vunpack.c.l.b16 %v260
        %v389 = vunpack.c.l.b16 %v261
        %v390 = vunpack.c.l.b16 %v262
        %v391 = vunpack.c.l.b16 %v263
        %v392 = vunpack.c.l.b16 %v264
        %v393 = vunpack.c.l.b16 %v265
        %v394 = vunpack.c.l.b16 %v266
        %v395 = vunpack.c.l.b16 %v267
        %v396 = vunpack.c.l.b16 %v268
        %v397 = vunpack.c.l.b16 %v269
        %v398 = vunpack.c.l.b16 %v270
        %v399 = vunpack.c.l.b16 %v271
        %v400 = vunpack.c.l.b16 %v272
        %v401 = vunpack.c.l.b16 %v273
        %v402 = vunpack.c.l.b16 %v274
        %v403 = vunpack.c.l.b16 %v275
        %v404 = vunpack.c.l.b16 %v276
        %v405 = vunpack.c.l.b16 %v277
        %v406 = vunpack.c.l.b16 %v278
        %v407 = vunpack.c.l.b16 %v279
        %v408 = vunpack.c.l.b16 %v280
        %v409 = vunpack.c.l.b16 %v281
        %v410 = vunpack.c.l.b16 %v282
        %v411 = vunpack.c.l.b16 %v283
        %v412 = vunpack.c.l.b16 %v284
        %v413 = vunpack.c.l.b16 %v285
        %v414 = vunpack.c.l.b16 %v286
        %v415 = vunpack.c.l.b16 %v287
        %v416 = vunpack.c.l.b16 %v288
        %v417 = vunpack.c.l.b16 %v289
        %v418 = vunpack.c.l.b16 %v290
        %v419 = vunpack.c.l.b16 %v291
        %v420 = vunpack.c.l.b16 %v292
        %v421 = vunpack.c.l.b16 %v293
        %v422 = vunpack.c.l.b16 %v294
        %v423 = vunpack.c.l.b16 %v295
        %v424 = vunpack.c.l.b16 %v296
        %v425 = vunpack.c.l.b16 %v297
        %v426 = vunpack.c.l.b16 %v298
        %v427 = vunpack.c.l.b16 %v299
        %v428 = vunpack.c.l.b16 %v300
        %v429 = vunpack.c.l.b16 %v301
        %v430 = vunpack.c.l.b16 %v302
        %v431 = vunpack.c.l.b16 %v303
        %v432 = vunpack.c.l.b16 %v304
        %v433 = vunpack.c.l.b16 %v305
        %v434 = vunpack.c.l.b16 %v306
        %v435 = vpack.c.b16 %v388, %v387
        %v436 = vpack.c.b16 %v390, %v389
        %v437 = vpack.c.b16 %v392, %v391
        %v438 = vpack.c.b16 %v394, %v393
        %v439 = vpack.c.b16 %v396, %v395
        %v440 = vpack.c.b16 %v398, %v397
        %v441 = vpack.c.b16 %v400, %v399
        %v442 = vpack.c.b16 %v402, %v401
        %v443 = vpack.c.b16 %v404, %v403
        %v444 = vpack.c.b16 %v406, %v405
        %v445 = vpack.c.b16 %v408, %v407
        %v446 = vpack.c.b16 %v410, %v409
        %v447 = vpack.c.b16 %v412, %v411
        %v448 = vpack.c.b16 %v414, %v413
        %v449 = vpack.c.b16 %v416, %v415
        %v450 = vpack.c.b16 %v418, %v417
        %v451 = vpack.c.b16 %v420, %v419
        %v452 = vpack.c.b16 %v422, %v421
        %v453 = vpack.c.b16 %v424, %v423
        %v454 = vpack.c.b16 %v426, %v425
        %v455 = vpack.c.b16 %v428, %v427
        %v456 = vpack.c.b16 %v430, %v429
        %v457 = vpack.c.b16 %v432, %v431
        %v458 = vpack.c.b16 %v434, %v433
        %483 = vmatprep.subr.bf16.mxu0 0
        %484 = vmatpush1.bf16.msra.mxu0 %v442
        %485 = vmatprep.subr.bf16.mxu0 0
        %486 = vmatpush1.bf16.msra.mxu0 %v441
        %487 = vmatprep.subr.bf16.mxu0 0
        %488 = vmatpush1.bf16.msra.mxu0 %v440
        %489 = vmatprep.subr.bf16.mxu0 0
        %490 = vmatpush1.bf16.msra.mxu0 %v439
        %491 = vmatprep.subr.bf16.mxu0 0
        %492 = vmatpush1.bf16.msra.mxu0 %v438
        %493 = vmatprep.subr.bf16.mxu0 0
        %494 = vmatpush1.bf16.msra.mxu0 %v437
        %495 = vmatprep.subr.bf16.mxu0 0
        %496 = vmatpush1.bf16.msra.mxu0 %v436
        %497 = vmatprep.subr.bf16.mxu0 0
        %498 = vmatpush1.bf16.msra.mxu0 %v435
        %499 = vmatprep.subr.bf16.mxu0 0
        %500 = vmatpush2.bf16.msra.mxu0 %v450
        %501 = vmatprep.subr.bf16.mxu0 0
        %502 = vmatpush2.bf16.msra.mxu0 %v449
        %503 = vmatprep.subr.bf16.mxu0 0
        %504 = vmatpush2.bf16.msra.mxu0 %v448
        %505 = vmatprep.subr.bf16.mxu0 0
        %506 = vmatpush2.bf16.msra.mxu0 %v447
        %507 = vmatprep.subr.bf16.mxu0 0
        %508 = vmatpush2.bf16.msra.mxu0 %v446
        %509 = vmatprep.subr.bf16.mxu0 0
        %510 = vmatpush2.bf16.msra.mxu0 %v445
        %511 = vmatprep.subr.bf16.mxu0 0
        %512 = vmatpush2.bf16.msra.mxu0 %v444
        %513 = vmatprep.subr.bf16.mxu0 0
        %514 = vmatpush2.bf16.msra.mxu0 %v443
        %515 = vmatprep.mubr.bf16.mxu0 %v334
        %516 = vmatmul.mubr.bf16.gmra.mxu0 %v333
        %v517 = vpop.f32.mrf.mxu0
        %v518 = vadd.f32 %v316, %v517
        %v519 = vpop.f32.mrf.mxu0
        %v520 = vpop.f32.mrf.mxu0
        %v521 = vadd.f32 %v321, %v520
        %v522 = vpop.f32.mrf.mxu0
        %523 = vdwg.mxu0
        %524 = vmatprep.subr.bf16.mxu0 0
        %525 = vmatpush1.bf16.msra.mxu0 %v458
        %526 = vmatprep.subr.bf16.mxu0 0
        %527 = vmatpush1.bf16.msra.mxu0 %v457
        %528 = vmatprep.subr.bf16.mxu0 0
        %529 = vmatpush1.bf16.msra.mxu0 %v456
        %530 = vmatprep.subr.bf16.mxu0 0
        %531 = vmatpush1.bf16.msra.mxu0 %v455
        %532 = vmatprep.subr.bf16.mxu0 0
        %533 = vmatpush1.bf16.msra.mxu0 %v454
        %534 = vmatprep.subr.bf16.mxu0 0
        %535 = vmatpush1.bf16.msra.mxu0 %v453
        %536 = vmatprep.subr.bf16.mxu0 0
        %537 = vmatpush1.bf16.msra.mxu0 %v452
        %538 = vmatprep.subr.bf16.mxu0 0
        %539 = vmatpush1.bf16.msra.mxu0 %v451
        %540 = vmatprep.subr.bf16.mxu0 0
        %541 = vmatpush2.bf16.msra.mxu0 0
        %542 = vmatprep.subr.bf16.mxu0 0
        %543 = vmatpush2.bf16.msra.mxu0 0
        %544 = vmatprep.subr.bf16.mxu0 0
        %545 = vmatpush2.bf16.msra.mxu0 0
        %546 = vmatprep.subr.bf16.mxu0 0
        %547 = vmatpush2.bf16.msra.mxu0 0
        %548 = vmatprep.subr.bf16.mxu0 0
        %549 = vmatpush2.bf16.msra.mxu0 0
        %550 = vmatprep.subr.bf16.mxu0 0
        %551 = vmatpush2.bf16.msra.mxu0 0
        %552 = vmatprep.subr.bf16.mxu0 0
        %553 = vmatpush2.bf16.msra.mxu0 0
        %554 = vmatprep.subr.bf16.mxu0 0
        %555 = vmatpush2.bf16.msra.mxu0 0
        %556 = vmatprep.mubr.bf16.mxu0 0
        %557 = vmatmul.mubr.bf16.gmra.mxu0 %v335
        %v558 = vpop.f32.mrf.mxu0
        %v559 = vadd.f32 %v518, %v558
        %v560 = vpop.f32.mrf.mxu0
        %v561 = vpop.f32.mrf.mxu0
        %v562 = vadd.f32 %v521, %v561
        %v563 = vpop.f32.mrf.mxu0
        %564 = vdwg.mxu0
        %v565 = vxor.u32 %v562, 2147483648
        %v566 = vmul.f32 %v565, 1.442695
        %v567 = vpow.pop %v566
        %v568 = vadd.f32 %v567, 1.0
        %v569 = vrcp.pop %v568
        %v570 = vmul.f32 1.0, %v569
        %v571 = vmul.f32 %v559, %v570
        %vm572 = vcmask 228352
        %v573 = vsel %vm572, %v571, 0.0
        %v574 = vrot.slane %v573, 4
        %v575 = vadd.f32 %v573, %v574
        %v576 = vrot.slane %v575, 2
        %v577 = vadd.f32 %v575, %v576
        %v578 = vrot.slane %v577, 1
        %v579 = vadd.f32 %v577, %v578
        %v580 = vmul.f32 %v571, %v571
        %v581 = vsel %vm572, %v580, 0.0
        %v582 = vrot.slane %v581, 4
        %v583 = vadd.f32 %v581, %v582
        %v584 = vrot.slane %v583, 2
        %v585 = vadd.f32 %v583, %v584
        %v586 = vrot.slane %v585, 1
        %v587 = vadd.f32 %v585, %v586
        %v588 = vld [vmem:[%s3] sm:$0xff]
        %v589 = vld [vmem:[%s3 + $0x8] sm:$0xff]
        %v590 = vld [vmem:[%s3 + $0x10] sm:$0xff]
        %v591 = vld [vmem:[%s3 + $0x18] sm:$0xf]
        %v593 = vsel %vm572, %v579, 0
        %vm595 = vcmask 1043456
        %v597 = vsel %vm595, %v591, 0
        %599 = vmatprep.subr.mxu0 0.0
        %600 = vmatpush1.msra.mxu0 0.0
        %601 = vmatprep.subr.mxu0 0.0
        %602 = vmatpush1.msra.mxu0 0.0
        %603 = vmatprep.subr.mxu0 0.0
        %604 = vmatpush1.msra.mxu0 0.0
        %605 = vmatprep.subr.mxu0 0.0
        %606 = vmatpush1.msra.mxu0 0.0
        %607 = vmatprep.subr.mxu0 0.0
        %608 = vmatpush1.msra.mxu0 0.0
        %609 = vmatprep.subr.mxu0 0.0
        %610 = vmatpush1.msra.mxu0 0.0
        %611 = vmatprep.subr.mxu0 0.0
        %612 = vmatpush1.msra.mxu0 0.0
        %613 = vmatprep.subr.mxu0 0.0
        %614 = vmatpush1.msra.mxu0 0.0
        %615 = vmatprep.subr.mxu0 0.0
        %616 = vmatpush1.msra.mxu0 0.0
        %617 = vmatprep.subr.mxu0 0.0
        %618 = vmatpush1.msra.mxu0 0.0
        %619 = vmatprep.subr.mxu0 0.0
        %620 = vmatpush1.msra.mxu0 0.0
        %621 = vmatprep.subr.mxu0 0.0
        %622 = vmatpush1.msra.mxu0 0.0
        %623 = vmatprep.subr.mxu0 0.0
        %624 = vmatpush1.msra.mxu0 %v597
        %625 = vmatprep.subr.mxu0 0.0
        %626 = vmatpush1.msra.mxu0 %v590
        %627 = vmatprep.subr.mxu0 0.0
        %628 = vmatpush1.msra.mxu0 %v589
        %629 = vmatprep.subr.mxu0 0.0
        %630 = vmatpush1.msra.mxu0 %v588
        %631 = vmatprep.subr.mxu0 0.0
        %632 = vmatpush2.msra.mxu0 0.0
        %633 = vmatprep.subr.mxu0 0.0
        %634 = vmatpush2.msra.mxu0 0.0
        %635 = vmatprep.subr.mxu0 0.0
        %636 = vmatpush2.msra.mxu0 0.0
        %637 = vmatprep.subr.mxu0 0.0
        %638 = vmatpush2.msra.mxu0 0.0
        %639 = vmatprep.subr.mxu0 0.0
        %640 = vmatpush2.msra.mxu0 0.0
        %641 = vmatprep.subr.mxu0 0.0
        %642 = vmatpush2.msra.mxu0 0.0
        %643 = vmatprep.subr.mxu0 0.0
        %644 = vmatpush2.msra.mxu0 0.0
        %645 = vmatprep.subr.mxu0 0.0
        %646 = vmatpush2.msra.mxu0 0.0
        %647 = vmatprep.subr.mxu0 0.0
        %648 = vmatpush2.msra.mxu0 0.0
        %649 = vmatprep.subr.mxu0 0.0
        %650 = vmatpush2.msra.mxu0 0.0
        %651 = vmatprep.subr.mxu0 0.0
        %652 = vmatpush2.msra.mxu0 0.0
        %653 = vmatprep.subr.mxu0 0.0
        %654 = vmatpush2.msra.mxu0 0.0
        %655 = vmatprep.subr.mxu0 0.0
        %656 = vmatpush2.msra.mxu0 0.0
        %657 = vmatprep.subr.mxu0 0.0
        %658 = vmatpush2.msra.mxu0 0.0
        %659 = vmatprep.subr.mxu0 0.0
        %660 = vmatpush2.msra.mxu0 0.0
        %661 = vmatprep.subr.mxu0 0.0
        %662 = vmatpush2.msra.mxu0 0.0
        %663 = vmatprep.mubr.f32.mxu0 0.0
        %664 = vmatmul.mubr.f32.gmra.mxu0 %v593
        %v665 = vpop.f32.mrf.mxu0
        %v666 = vadd.f32 0.0, %v665
        %v667 = vpop.f32.mrf.mxu0
        %668 = vdwg.mxu0
        %v670 = vsel %vm572, %v587, 0
        %672 = vmatprep.subr.mxu0 0.0
        %673 = vmatpush1.msra.mxu0 0.0
        %674 = vmatprep.subr.mxu0 0.0
        %675 = vmatpush1.msra.mxu0 0.0
        %676 = vmatprep.subr.mxu0 0.0
        %677 = vmatpush1.msra.mxu0 0.0
        %678 = vmatprep.subr.mxu0 0.0
        %679 = vmatpush1.msra.mxu0 0.0
        %680 = vmatprep.subr.mxu0 0.0
        %681 = vmatpush1.msra.mxu0 0.0
        %682 = vmatprep.subr.mxu0 0.0
        %683 = vmatpush1.msra.mxu0 0.0
        %684 = vmatprep.subr.mxu0 0.0
        %685 = vmatpush1.msra.mxu0 0.0
        %686 = vmatprep.subr.mxu0 0.0
        %687 = vmatpush1.msra.mxu0 0.0
        %688 = vmatprep.subr.mxu0 0.0
        %689 = vmatpush1.msra.mxu0 0.0
        %690 = vmatprep.subr.mxu0 0.0
        %691 = vmatpush1.msra.mxu0 0.0
        %692 = vmatprep.subr.mxu0 0.0
        %693 = vmatpush1.msra.mxu0 0.0
        %694 = vmatprep.subr.mxu0 0.0
        %695 = vmatpush1.msra.mxu0 0.0
        %696 = vmatprep.subr.mxu0 0.0
        %697 = vmatpush1.msra.mxu0 %v597
        %698 = vmatprep.subr.mxu0 0.0
        %699 = vmatpush1.msra.mxu0 %v590
        %700 = vmatprep.subr.mxu0 0.0
        %701 = vmatpush1.msra.mxu0 %v589
        %702 = vmatprep.subr.mxu0 0.0
        %703 = vmatpush1.msra.mxu0 %v588
        %704 = vmatprep.subr.mxu0 0.0
        %705 = vmatpush2.msra.mxu0 0.0
        %706 = vmatprep.subr.mxu0 0.0
        %707 = vmatpush2.msra.mxu0 0.0
        %708 = vmatprep.subr.mxu0 0.0
        %709 = vmatpush2.msra.mxu0 0.0
        %710 = vmatprep.subr.mxu0 0.0
        %711 = vmatpush2.msra.mxu0 0.0
        %712 = vmatprep.subr.mxu0 0.0
        %713 = vmatpush2.msra.mxu0 0.0
        %714 = vmatprep.subr.mxu0 0.0
        %715 = vmatpush2.msra.mxu0 0.0
        %716 = vmatprep.subr.mxu0 0.0
        %717 = vmatpush2.msra.mxu0 0.0
        %718 = vmatprep.subr.mxu0 0.0
        %719 = vmatpush2.msra.mxu0 0.0
        %720 = vmatprep.subr.mxu0 0.0
        %721 = vmatpush2.msra.mxu0 0.0
        %722 = vmatprep.subr.mxu0 0.0
        %723 = vmatpush2.msra.mxu0 0.0
        %724 = vmatprep.subr.mxu0 0.0
        %725 = vmatpush2.msra.mxu0 0.0
        %726 = vmatprep.subr.mxu0 0.0
        %727 = vmatpush2.msra.mxu0 0.0
        %728 = vmatprep.subr.mxu0 0.0
        %729 = vmatpush2.msra.mxu0 0.0
        %730 = vmatprep.subr.mxu0 0.0
        %731 = vmatpush2.msra.mxu0 0.0
        %732 = vmatprep.subr.mxu0 0.0
        %733 = vmatpush2.msra.mxu0 0.0
        %734 = vmatprep.subr.mxu0 0.0
        %735 = vmatpush2.msra.mxu0 0.0
        %736 = vmatprep.mubr.f32.mxu0 0.0
        %737 = vmatmul.mubr.f32.gmra.mxu0 %v670
        %v738 = vpop.f32.mrf.mxu0
        %v739 = vadd.f32 0.0, %v738
        %v740 = vpop.f32.mrf.mxu0
        %741 = vdwg.mxu0
        %v742 = vlaneseq
        %v743 = vshrl.u32 %v742, 7
        %v744 = vlaneseq
        %v745 = vand.u32 %v744, 127
        %vm746 = vcmp.le.s32.totalorder %v743, %v745
        %v747 = vsel %vm746, 1, 0
        %v748 = vcvt.s32.f32 %v747
        %v749 = vld [vmem:[#allocation2] sm:$0x1]
        %v750 = vld [vmem:[#allocation3] sm:$0x1]
        %752 = vset.pattern.permute.xlu0 0
        %753 = vperm.xlu0 %752, %v749
        %v754 = vpop.permute.xlu0 %753
        %v756 = vlaneseq
        %v757 = vshrl.u32 %v756, 7
        %v758 = vsub.s32 0, %v757
        %v759 = vrot.slane %v754, %v758
        %vm760 = vcmask 31744
        %v762 = vsel %vm760, %v666, 0
        %v765 = vsel %vm595, %v748, 0
        %767 = vmatprep.subr.mxu0 0.0
        %768 = vmatpush1.msra.mxu0 0.0
        %769 = vmatprep.subr.mxu0 0.0
        %770 = vmatpush1.msra.mxu0 0.0
        %771 = vmatprep.subr.mxu0 0.0
        %772 = vmatpush1.msra.mxu0 0.0
        %773 = vmatprep.subr.mxu0 0.0
        %774 = vmatpush1.msra.mxu0 0.0
        %775 = vmatprep.subr.mxu0 0.0
        %776 = vmatpush1.msra.mxu0 0.0
        %777 = vmatprep.subr.mxu0 0.0
        %778 = vmatpush1.msra.mxu0 0.0
        %779 = vmatprep.subr.mxu0 0.0
        %780 = vmatpush1.msra.mxu0 0.0
        %781 = vmatprep.subr.mxu0 0.0
        %782 = vmatpush1.msra.mxu0 0.0
        %783 = vmatprep.subr.mxu0 0.0
        %784 = vmatpush1.msra.mxu0 0.0
        %785 = vmatprep.subr.mxu0 0.0
        %786 = vmatpush1.msra.mxu0 0.0
        %787 = vmatprep.subr.mxu0 0.0
        %788 = vmatpush1.msra.mxu0 0.0
        %789 = vmatprep.subr.mxu0 0.0
        %790 = vmatpush1.msra.mxu0 0.0
        %791 = vmatprep.subr.mxu0 0.0
        %792 = vmatpush1.msra.mxu0 0.0
        %793 = vmatprep.subr.mxu0 0.0
        %794 = vmatpush1.msra.mxu0 0.0
        %795 = vmatprep.subr.mxu0 0.0
        %796 = vmatpush1.msra.mxu0 0.0
        %797 = vmatprep.subr.mxu0 0.0
        %798 = vmatpush1.msra.mxu0 %v765
        %799 = vmatprep.subr.mxu0 0.0
        %800 = vmatpush2.msra.mxu0 0.0
        %801 = vmatprep.subr.mxu0 0.0
        %802 = vmatpush2.msra.mxu0 0.0
        %803 = vmatprep.subr.mxu0 0.0
        %804 = vmatpush2.msra.mxu0 0.0
        %805 = vmatprep.subr.mxu0 0.0
        %806 = vmatpush2.msra.mxu0 0.0
        %807 = vmatprep.subr.mxu0 0.0
        %808 = vmatpush2.msra.mxu0 0.0
        %809 = vmatprep.subr.mxu0 0.0
        %810 = vmatpush2.msra.mxu0 0.0
        %811 = vmatprep.subr.mxu0 0.0
        %812 = vmatpush2.msra.mxu0 0.0
        %813 = vmatprep.subr.mxu0 0.0
        %814 = vmatpush2.msra.mxu0 0.0
        %815 = vmatprep.subr.mxu0 0.0
        %816 = vmatpush2.msra.mxu0 0.0
        %817 = vmatprep.subr.mxu0 0.0
        %818 = vmatpush2.msra.mxu0 0.0
        %819 = vmatprep.subr.mxu0 0.0
        %820 = vmatpush2.msra.mxu0 0.0
        %821 = vmatprep.subr.mxu0 0.0
        %822 = vmatpush2.msra.mxu0 0.0
        %823 = vmatprep.subr.mxu0 0.0
        %824 = vmatpush2.msra.mxu0 0.0
        %825 = vmatprep.subr.mxu0 0.0
        %826 = vmatpush2.msra.mxu0 0.0
        %827 = vmatprep.subr.mxu0 0.0
        %828 = vmatpush2.msra.mxu0 0.0
        %829 = vmatprep.subr.mxu0 0.0
        %830 = vmatpush2.msra.mxu0 0.0
        %831 = vmatprep.mubr.f32.mxu0 0.0
        %832 = vmatmul.mubr.f32.gmra.mxu0 %v762
        %v833 = vpop.f32.mrf.mxu0
        %v834 = vadd.f32 %v759, %v833
        %v835 = vpop.f32.mrf.mxu0
        %836 = vdwg.mxu0
        %838 = vset.pattern.permute.xlu0 0
        %839 = vperm.xlu0 %838, %v750
        %v840 = vpop.permute.xlu0 %839
        %v842 = vlaneseq
        %v843 = vshrl.u32 %v842, 7
        %v844 = vsub.s32 0, %v843
        %v845 = vrot.slane %v840, %v844
        %v847 = vsel %vm760, %v739, 0
        %849 = vmatprep.subr.mxu0 0.0
        %850 = vmatpush1.msra.mxu0 0.0
        %851 = vmatprep.subr.mxu0 0.0
        %852 = vmatpush1.msra.mxu0 0.0
        %853 = vmatprep.subr.mxu0 0.0
        %854 = vmatpush1.msra.mxu0 0.0
        %855 = vmatprep.subr.mxu0 0.0
        %856 = vmatpush1.msra.mxu0 0.0
        %857 = vmatprep.subr.mxu0 0.0
        %858 = vmatpush1.msra.mxu0 0.0
        %859 = vmatprep.subr.mxu0 0.0
        %860 = vmatpush1.msra.mxu0 0.0
        %861 = vmatprep.subr.mxu0 0.0
        %862 = vmatpush1.msra.mxu0 0.0
        %863 = vmatprep.subr.mxu0 0.0
        %864 = vmatpush1.msra.mxu0 0.0
        %865 = vmatprep.subr.mxu0 0.0
        %866 = vmatpush1.msra.mxu0 0.0
        %867 = vmatprep.subr.mxu0 0.0
        %868 = vmatpush1.msra.mxu0 0.0
        %869 = vmatprep.subr.mxu0 0.0
        %870 = vmatpush1.msra.mxu0 0.0
        %871 = vmatprep.subr.mxu0 0.0
        %872 = vmatpush1.msra.mxu0 0.0
        %873 = vmatprep.subr.mxu0 0.0
        %874 = vmatpush1.msra.mxu0 0.0
        %875 = vmatprep.subr.mxu0 0.0
        %876 = vmatpush1.msra.mxu0 0.0
        %877 = vmatprep.subr.mxu0 0.0
        %878 = vmatpush1.msra.mxu0 0.0
        %879 = vmatprep.subr.mxu0 0.0
        %880 = vmatpush1.msra.mxu0 %v765
        %881 = vmatprep.subr.mxu0 0.0
        %882 = vmatpush2.msra.mxu0 0.0
        %883 = vmatprep.subr.mxu0 0.0
        %884 = vmatpush2.msra.mxu0 0.0
        %885 = vmatprep.subr.mxu0 0.0
        %886 = vmatpush2.msra.mxu0 0.0
        %887 = vmatprep.subr.mxu0 0.0
        %888 = vmatpush2.msra.mxu0 0.0
        %889 = vmatprep.subr.mxu0 0.0
        %890 = vmatpush2.msra.mxu0 0.0
        %891 = vmatprep.subr.mxu0 0.0
        %892 = vmatpush2.msra.mxu0 0.0
        %893 = vmatprep.subr.mxu0 0.0
        %894 = vmatpush2.msra.mxu0 0.0
        %895 = vmatprep.subr.mxu0 0.0
        %896 = vmatpush2.msra.mxu0 0.0
        %897 = vmatprep.subr.mxu0 0.0
        %898 = vmatpush2.msra.mxu0 0.0
        %899 = vmatprep.subr.mxu0 0.0
        %900 = vmatpush2.msra.mxu0 0.0
        %901 = vmatprep.subr.mxu0 0.0
        %902 = vmatpush2.msra.mxu0 0.0
        %903 = vmatprep.subr.mxu0 0.0
        %904 = vmatpush2.msra.mxu0 0.0
        %905 = vmatprep.subr.mxu0 0.0
        %906 = vmatpush2.msra.mxu0 0.0
        %907 = vmatprep.subr.mxu0 0.0
        %908 = vmatpush2.msra.mxu0 0.0
        %909 = vmatprep.subr.mxu0 0.0
        %910 = vmatpush2.msra.mxu0 0.0
        %911 = vmatprep.subr.mxu0 0.0
        %912 = vmatpush2.msra.mxu0 0.0
        %913 = vmatprep.mubr.f32.mxu0 0.0
        %914 = vmatmul.mubr.f32.gmra.mxu0 %v847
        %v915 = vpop.f32.mrf.mxu0
        %v916 = vadd.f32 %v845, %v915
        %v917 = vpop.f32.mrf.mxu0
        %918 = vdwg.mxu0
        %vm919 = vcmask 24576
        %v920 = vsel %vm919, %v666, 0.0
        %921 = vadd.xlane.f32.xlu0 %v920
        %v922 = vpop.xlane.xlu0 %921
        %v923 = vadd.f32 %v749, %v922
        %vm924 = vcmask 0
        %925 = vst.msk [vmem:[#allocation2] sm:$0x1] %vm924, %v923
        %v926 = vsel %vm919, %v739, 0.0
        %927 = vadd.xlane.f32.xlu0 %v926
        %v928 = vpop.xlane.xlu0 %927
        %v929 = vadd.f32 %v750, %v928
        %930 = vst.msk [vmem:[#allocation3] sm:$0x1] %vm924, %v929
        %v931 = vcvt.s32.f32 %v745
        %s932 = smul.u32 %s24, 4
        %s933 = scvt.s32.f32 %s932
        %v934 = vstv %s933
        %v935 = vadd.f32 %v934, %v931
        %v936 = vadd.f32 %v935, 1.0
        %v937 = vmul.f32 %v936, 56.0
        %v938 = vrcp.pop %v937
        %v939 = vmul.f32 1.0, %v938
        %v940 = vmul.f32 %v834, %v939
        %v941 = vmul.f32 %v940, 2.0
        %v942 = vmul.f32 %v941, %v834
        %v943 = vsub.f32 %v916, %v942
        %v944 = vmul.f32 %v943, %v939
        %v945 = vmul.f32 %v940, %v940
        %v946 = vadd.f32 %v944, %v945
        %v947 = vmax.f32 %v946, 0.0
        %v948 = vadd.f32 %v947, 1e-05
        %v949 = vrsqrt.pop %v948
        %v950 = vld [vmem:[%s4] sm:$0xf]
        %v952 = vsel %vm760, %v940, 0
        %v955 = vsel %vm595, %v950, 0
        %957 = vmatprep.subr.mxu0 0.0
        %958 = vmatpush1.msra.mxu0 0.0
        %959 = vmatprep.subr.mxu0 0.0
        %960 = vmatpush1.msra.mxu0 0.0
        %961 = vmatprep.subr.mxu0 0.0
        %962 = vmatpush1.msra.mxu0 0.0
        %963 = vmatprep.subr.mxu0 0.0
        %964 = vmatpush1.msra.mxu0 0.0
        %965 = vmatprep.subr.mxu0 0.0
        %966 = vmatpush1.msra.mxu0 0.0
        %967 = vmatprep.subr.mxu0 0.0
        %968 = vmatpush1.msra.mxu0 0.0
        %969 = vmatprep.subr.mxu0 0.0
        %970 = vmatpush1.msra.mxu0 0.0
        %971 = vmatprep.subr.mxu0 0.0
        %972 = vmatpush1.msra.mxu0 0.0
        %973 = vmatprep.subr.mxu0 0.0
        %974 = vmatpush1.msra.mxu0 0.0
        %975 = vmatprep.subr.mxu0 0.0
        %976 = vmatpush1.msra.mxu0 0.0
        %977 = vmatprep.subr.mxu0 0.0
        %978 = vmatpush1.msra.mxu0 0.0
        %979 = vmatprep.subr.mxu0 0.0
        %980 = vmatpush1.msra.mxu0 0.0
        %981 = vmatprep.subr.mxu0 0.0
        %982 = vmatpush1.msra.mxu0 0.0
        %983 = vmatprep.subr.mxu0 0.0
        %984 = vmatpush1.msra.mxu0 0.0
        %985 = vmatprep.subr.mxu0 0.0
        %986 = vmatpush1.msra.mxu0 0.0
        %987 = vmatprep.subr.mxu0 0.0
        %988 = vmatpush1.msra.mxu0 %v955
        %989 = vmatprep.subr.mxu0 0.0
        %990 = vmatpush2.msra.mxu0 0.0
        %991 = vmatprep.subr.mxu0 0.0
        %992 = vmatpush2.msra.mxu0 0.0
        %993 = vmatprep.subr.mxu0 0.0
        %994 = vmatpush2.msra.mxu0 0.0
        %995 = vmatprep.subr.mxu0 0.0
        %996 = vmatpush2.msra.mxu0 0.0
        %997 = vmatprep.subr.mxu0 0.0
        %998 = vmatpush2.msra.mxu0 0.0
        %999 = vmatprep.subr.mxu0 0.0
        %1000 = vmatpush2.msra.mxu0 0.0
        %1001 = vmatprep.subr.mxu0 0.0
        %1002 = vmatpush2.msra.mxu0 0.0
        %1003 = vmatprep.subr.mxu0 0.0
        %1004 = vmatpush2.msra.mxu0 0.0
        %1005 = vmatprep.subr.mxu0 0.0
        %1006 = vmatpush2.msra.mxu0 0.0
        %1007 = vmatprep.subr.mxu0 0.0
        %1008 = vmatpush2.msra.mxu0 0.0
        %1009 = vmatprep.subr.mxu0 0.0
        %1010 = vmatpush2.msra.mxu0 0.0
        %1011 = vmatprep.subr.mxu0 0.0
        %1012 = vmatpush2.msra.mxu0 0.0
        %1013 = vmatprep.subr.mxu0 0.0
        %1014 = vmatpush2.msra.mxu0 0.0
        %1015 = vmatprep.subr.mxu0 0.0
        %1016 = vmatpush2.msra.mxu0 0.0
        %1017 = vmatprep.subr.mxu0 0.0
        %1018 = vmatpush2.msra.mxu0 0.0
        %1019 = vmatprep.subr.mxu0 0.0
        %1020 = vmatpush2.msra.mxu0 0.0
        %1021 = vmatprep.mubr.f32.mxu0 0.0
        %1022 = vmatmul.mubr.f32.gmra.mxu0 %v952
        %v1023 = vpop.f32.mrf.mxu0
        %v1024 = vadd.f32 0.0, %v1023
        %v1025 = vpop.f32.mrf.mxu0
        %1026 = vdwg.mxu0
        %v1028 = vsel %vm760, %v949, 0
        %1030 = vmatprep.subr.mxu0 0.0
        %1031 = vmatpush1.msra.mxu0 0.0
        %1032 = vmatprep.subr.mxu0 0.0
        %1033 = vmatpush1.msra.mxu0 0.0
        %1034 = vmatprep.subr.mxu0 0.0
        %1035 = vmatpush1.msra.mxu0 0.0
        %1036 = vmatprep.subr.mxu0 0.0
        %1037 = vmatpush1.msra.mxu0 0.0
        %1038 = vmatprep.subr.mxu0 0.0
        %1039 = vmatpush1.msra.mxu0 0.0
        %1040 = vmatprep.subr.mxu0 0.0
        %1041 = vmatpush1.msra.mxu0 0.0
        %1042 = vmatprep.subr.mxu0 0.0
        %1043 = vmatpush1.msra.mxu0 0.0
        %1044 = vmatprep.subr.mxu0 0.0
        %1045 = vmatpush1.msra.mxu0 0.0
        %1046 = vmatprep.subr.mxu0 0.0
        %1047 = vmatpush1.msra.mxu0 0.0
        %1048 = vmatprep.subr.mxu0 0.0
        %1049 = vmatpush1.msra.mxu0 0.0
        %1050 = vmatprep.subr.mxu0 0.0
        %1051 = vmatpush1.msra.mxu0 0.0
        %1052 = vmatprep.subr.mxu0 0.0
        %1053 = vmatpush1.msra.mxu0 0.0
        %1054 = vmatprep.subr.mxu0 0.0
        %1055 = vmatpush1.msra.mxu0 0.0
        %1056 = vmatprep.subr.mxu0 0.0
        %1057 = vmatpush1.msra.mxu0 0.0
        %1058 = vmatprep.subr.mxu0 0.0
        %1059 = vmatpush1.msra.mxu0 0.0
        %1060 = vmatprep.subr.mxu0 0.0
        %1061 = vmatpush1.msra.mxu0 %v955
        %1062 = vmatprep.subr.mxu0 0.0
        %1063 = vmatpush2.msra.mxu0 0.0
        %1064 = vmatprep.subr.mxu0 0.0
        %1065 = vmatpush2.msra.mxu0 0.0
        %1066 = vmatprep.subr.mxu0 0.0
        %1067 = vmatpush2.msra.mxu0 0.0
        %1068 = vmatprep.subr.mxu0 0.0
        %1069 = vmatpush2.msra.mxu0 0.0
        %1070 = vmatprep.subr.mxu0 0.0
        %1071 = vmatpush2.msra.mxu0 0.0
        %1072 = vmatprep.subr.mxu0 0.0
        %1073 = vmatpush2.msra.mxu0 0.0
        %1074 = vmatprep.subr.mxu0 0.0
        %1075 = vmatpush2.msra.mxu0 0.0
        %1076 = vmatprep.subr.mxu0 0.0
        %1077 = vmatpush2.msra.mxu0 0.0
        %1078 = vmatprep.subr.mxu0 0.0
        %1079 = vmatpush2.msra.mxu0 0.0
        %1080 = vmatprep.subr.mxu0 0.0
        %1081 = vmatpush2.msra.mxu0 0.0
        %1082 = vmatprep.subr.mxu0 0.0
        %1083 = vmatpush2.msra.mxu0 0.0
        %1084 = vmatprep.subr.mxu0 0.0
        %1085 = vmatpush2.msra.mxu0 0.0
        %1086 = vmatprep.subr.mxu0 0.0
        %1087 = vmatpush2.msra.mxu0 0.0
        %1088 = vmatprep.subr.mxu0 0.0
        %1089 = vmatpush2.msra.mxu0 0.0
        %1090 = vmatprep.subr.mxu0 0.0
        %1091 = vmatpush2.msra.mxu0 0.0
        %1092 = vmatprep.subr.mxu0 0.0
        %1093 = vmatpush2.msra.mxu0 0.0
        %1094 = vmatprep.mubr.f32.mxu0 0.0
        %1095 = vmatmul.mubr.f32.gmra.mxu0 %v1028
        %v1096 = vpop.f32.mrf.mxu0
        %v1097 = vadd.f32 0.0, %v1096
        %v1098 = vpop.f32.mrf.mxu0
        %1099 = vdwg.mxu0
        %v1100 = vlaneseq
        %v1101 = vshrl.u32 %v1100, 7
        %v1102 = vsub.s32 0, %v1101
        %v1103 = vrot.slane %v1024, %v1102
        %v1104 = vsub.f32 %v571, %v1103
        %v1105 = vlaneseq
        %v1106 = vshrl.u32 %v1105, 7
        %v1107 = vsub.s32 0, %v1106
        %v1108 = vrot.slane %v1097, %v1107
        %v1109 = vmul.f32 %v1104, %v1108
        %v1110 = vld [vmem:[%s2] sm:$0xff]
        %1112 = vset.pattern.permute.xlu0 1
        %1113 = vperm.xlu0 %1112, %v1110
        %v1114 = vpop.permute.xlu0 %1113
        %v1116 = vmul.f32 %v1109, %v1114
        %1117 = vset.pattern.permute.xlu0 2
        %1118 = vperm.xlu0 %1117, %v1110
        %v1119 = vpop.permute.xlu0 %1118
        %v1121 = vadd.f32 %v1116, %v1119
        %vm1122 = vcmp.ge.f32.partialorder %v1121, 0.0
        %1123 = vset.pattern.permute.xlu0 3
        %1124 = vperm.xlu0 %1123, %v1110
        %v1125 = vpop.permute.xlu0 %1124
        %v1127 = vmul.f32 %v1121, %v1125
        %v1128 = vsel %vm1122, %v1121, %v1127
        %v1129 = vpack.c.bf16 %v1128, %v1128
        %vm1130 = vcmask 224256
        %1131 = vst.msk [vmem:[%s241] sm:$0xf] %vm1130, %v1129
        %s1132 = sand.u32 %s153, 1
        %s1133 = scalar_lea.sflag [#allocation5], %s1132
        %s1134 = sand.u32 %s153, 1
        %s1135 = smul.addr %s1134, 4
        %s1136 = scalar_lea.vmem [#allocation4], %s1135
        // Predicated region
        $region45: #{tpu_custom_call.1} parent=39 // pred_check
          %p1137 = pneg %p163
        $region46: #{tpu_custom_call.1} parent=39 // pred_check_branch
          %1139 = sbr.rel (%p1137) target = $region48
        $region47: #{tpu_custom_call.1} parent=39 // pred_region
          %s1141 = ssub.s32 64, 64
          %1142 = vsyncadd %s1133, %s1141
          %s1143 = sadd.s32 %s24, %s23
          %s1144 = smul.addr %s1143, 64
          %s1145 = scalar_lea.hbm %s5, %s1144
          %s1147 = sshll.u32 %s1136, 4
          %s1148 = int_to_ptr.vmem [resolvable:$true] %s1147
          %1150 = dma.vmem_to_hbm [thread:$0]  %s1148, 64, %s1145, %s1133
        $region48: #{tpu_custom_call.1} parent=39 // pred_fallthru
          _
      $region40: #{tpu_custom_call.1} parent=5 // pred_fallthru
        _
      %p1151 = scmp.le.s32.totalorder 2, %s14
      // Predicated region
      $region49: #{tpu_custom_call.1} parent=5 // pred_check
        %p1152 = pneg %p1151
      $region50: #{tpu_custom_call.1} parent=5 // pred_check_branch
        %1154 = sbr.rel (%p1152) target = $region52
      $region51: #{tpu_custom_call.1} parent=5 // pred_region
        %s1155 = ssub.s32 %s14, 2
        // Predicated region
        $region53: #{tpu_custom_call.1} parent=51 // pred_check
          %p1156 = pneg %p169
        $region54: #{tpu_custom_call.1} parent=51 // pred_check_branch
          %1158 = sbr.rel (%p1156) target = $region56
        $region55: #{tpu_custom_call.1} parent=51 // pred_region
          %s1159 = sand.u32 %s154, 1
          %s1160 = scalar_lea.sflag [#allocation5], %s1159
          %s1161 = sand.u32 %s154, 1
          %s1162 = smul.addr %s1161, 4
          %s1163 = scalar_lea.vmem [#allocation4], %s1162
          %1164 = dma.done %s1160, 64
        $region56: #{tpu_custom_call.1} parent=51 // pred_fallthru
          _
      $region52: #{tpu_custom_call.1} parent=5 // pred_fallthru
        _
    $region6: #{tpu_custom_call.1} parent=1 // loop_footer
      %s18 = sadd.s32 1, %s14
    $region7: #{tpu_custom_call.1} parent=1 // loop_footer_branch
      %13 = sbr.rel target = $region3
    $region8: #{tpu_custom_call.1} parent=1 // loop_exit
      _
    %1165 = vsyncpa [#allocation5], 1
    %s1166 = scalar_lea.sflag [#allocation5], 1
    %1167 = vsyncpa %s1166, 1

</llo_original>
